<compile_context>
chip_gen: v7x
topology: tpu7x:2x2x1
jax: 0.10.0
libtpu: 0.0.40
codegen_flags: <defaults>
</compile_context>

<pallas_src>
import functools
import math

import jax
import jax.numpy as jnp
from jax.experimental import pallas as pl
from jax.experimental.pallas import tpu as pltpu

EPS = 1e-6          # Norm(d_model, eps=1e-6)
_NEG = -1e9         # masked_fill value used by the reference attention

# Conservative on every generation (<= v7x physical 64 MiB, raises v5e default).
# TODO(synk): re-derive / generation-gate this budget for production shapes.
VMEM_LIMIT_BYTES = 32 * 1024 * 1024

ENC_NAMES = ['n1a', 'n1b', 'wqkv', 'bqkv', 'wo', 'bo',
             'n2a', 'n2b', 'w1', 'b1', 'w2', 'b2']
DEC_NAMES = ['n1a', 'n1b', 'wqkv', 'bqkv', 'wo1', 'bo1',
             'n2a', 'n2b', 'wq2', 'bq2', 'wkv2', 'bkv2', 'wo2', 'bo2',
             'n3a', 'n3b', 'w1', 'b1', 'w2', 'b2']


# ----------------------------- in-kernel helpers -----------------------------

def _norm(x, alpha, beta, d):
    """PyTorch `Norm`: alpha*(x-mean)/(x.std(unbiased)+eps)+bias over last dim."""
    mean = jnp.mean(x, axis=-1, keepdims=True)
    var = jnp.sum((x - mean) ** 2, axis=-1, keepdims=True) / (d - 1)  # ddof=1
    return alpha * (x - mean) / (jnp.sqrt(var) + EPS) + beta


def _mha_accum(q, k, v, wo, bo, mask, heads):
    """Multi-head attention.  Per-head context is folded directly through the
    matching rows of Wo (attn = sum_h (p_h @ v_h) @ Wo[h*dh:(h+1)*dh, :]), so
    no lane-axis concatenate is materialized.  The 1/sqrt(dh) scale is already
    folded into the Q projection.  q/k/v are f32; MXU inputs are cast to bf16.
    """
    sq, d = q.shape
    dh = d // heads
    acc = jnp.zeros((sq, d), jnp.float32)
    # Static unroll: heads is small; the serial accumulation into `acc` bounds
    # the number of simultaneously-live (Sq, Sk) score tensors.
    for h in range(heads):
        qh = q[:, h * dh:(h + 1) * dh].astype(jnp.bfloat16)
        kh = k[:, h * dh:(h + 1) * dh].astype(jnp.bfloat16)
        vh = v[:, h * dh:(h + 1) * dh].astype(jnp.bfloat16)
        sc = jnp.einsum('qd,kd->qk', qh, kh,
                        preferred_element_type=jnp.float32)
        sc = jnp.where(mask == 0, _NEG, sc)
        sc = sc - jnp.max(sc, axis=-1, keepdims=True)
        p = jnp.exp(sc)
        p = p * pl.reciprocal(jnp.sum(p, axis=-1, keepdims=True), approx=True)
        ctx = jnp.dot(p.astype(jnp.bfloat16), vh,
                      preferred_element_type=jnp.float32)          # (Sq, dh)
        acc = acc + jnp.dot(ctx.astype(jnp.bfloat16),
                            wo[h * dh:(h + 1) * dh, :],
                            preferred_element_type=jnp.float32)
    return acc + bo


# ----------------------------- kernels -----------------------------

def encoder_stack_kernel(x_ref, mask_ref,
                         n1a, n1b, wqkv, bqkv, wo, bo,
                         n2a, n2b, w1, b1, w2, b2,
                         fna, fnb,
                         o_ref, x_sc, *, heads):
    """grid=(B, L): all encoder layers for one batch element; the activation is
    carried in VMEM scratch across the layer axis, final Norm in the epilogue."""
    l = pl.program_id(1)

    @pl.when(l == 0)
    def _():
        x_sc[...] = x_ref[0].astype(jnp.float32)

    x = x_sc[...]                               # (S, D) f32
    d = x.shape[-1]
    mask = mask_ref[0]                          # (1, S) broadcast over queries

    # --- self-attention sub-block (pre-norm + residual) ---
    x2 = _norm(x, n1a[0], n1b[0], d).astype(jnp.bfloat16)
    qkv = jnp.dot(x2, wqkv[0], preferred_element_type=jnp.float32) + bqkv[0]
    attn = _mha_accum(qkv[:, :d], qkv[:, d:2 * d], qkv[:, 2 * d:],
                      wo[0], bo[0], mask, heads)
    x = x + attn                                # dropout_1: identity (eval)

    # --- feed-forward sub-block (pre-norm + residual) ---
    x2 = _norm(x, n2a[0], n2b[0], d).astype(jnp.bfloat16)
    hid = jnp.dot(x2, w1[0], preferred_element_type=jnp.float32) + b1[0]
    hid = jnp.maximum(hid, 0.0).astype(jnp.bfloat16)
    x = x + jnp.dot(hid, w2[0], preferred_element_type=jnp.float32) + b2[0]

    x_sc[...] = x

    @pl.when(l == pl.num_programs(1) - 1)
    def _():
        o_ref[0] = _norm(x, fna[...], fnb[...], d).astype(o_ref.dtype)


def decoder_stack_kernel(x_ref, eo_ref, smask_ref, tmask_ref,
                         n1a, n1b, wqkv, bqkv, wo1, bo1,
                         n2a, n2b, wq2, bq2, wkv2, bkv2, wo2, bo2,
                         n3a, n3b, w1, b1, w2, b2,
                         fna, fnb,
                         o_ref, x_sc, *, heads):
    """grid=(B, L): all decoder layers for one batch element."""
    l = pl.program_id(1)

    @pl.when(l == 0)
    def _():
        x_sc[...] = x_ref[0].astype(jnp.float32)

    x = x_sc[...]                               # (S_trg, D) f32
    d = x.shape[-1]
    eo = eo_ref[0].astype(jnp.bfloat16)         # (S_src, D) encoder outputs
    src_mask = smask_ref[0]                     # (1, S_src)
    trg_mask = tmask_ref[0]                     # (S_trg, S_trg)

    # --- masked self-attention (pre-norm + residual) ---
    x2 = _norm(x, n1a[0], n1b[0], d).astype(jnp.bfloat16)
    qkv = jnp.dot(x2, wqkv[0], preferred_element_type=jnp.float32) + bqkv[0]
    x = x + _mha_accum(qkv[:, :d], qkv[:, d:2 * d], qkv[:, 2 * d:],
                       wo1[0], bo1[0], trg_mask, heads)

    # --- cross-attention over encoder outputs (pre-norm + residual) ---
    x2 = _norm(x, n2a[0], n2b[0], d).astype(jnp.bfloat16)
    q = jnp.dot(x2, wq2[0], preferred_element_type=jnp.float32) + bq2[0]
    kv = jnp.dot(eo, wkv2[0], preferred_element_type=jnp.float32) + bkv2[0]
    x = x + _mha_accum(q, kv[:, :d], kv[:, d:],
                       wo2[0], bo2[0], src_mask, heads)

    # --- feed-forward (pre-norm + residual) ---
    x2 = _norm(x, n3a[0], n3b[0], d).astype(jnp.bfloat16)
    hid = jnp.dot(x2, w1[0], preferred_element_type=jnp.float32) + b1[0]
    hid = jnp.maximum(hid, 0.0).astype(jnp.bfloat16)
    x = x + jnp.dot(hid, w2[0], preferred_element_type=jnp.float32) + b2[0]

    x_sc[...] = x

    @pl.when(l == pl.num_programs(1) - 1)
    def _():
        o_ref[0] = _norm(x, fna[...], fnb[...], d).astype(o_ref.dtype)


def out_proj_kernel(x_ref, w_ref, b_ref, o_ref):
    """Final nn.Linear(d_model, trg_vocab)."""
    x = x_ref[0].astype(jnp.bfloat16)
    o_ref[0] = (jnp.dot(x, w_ref[...], preferred_element_type=jnp.float32)
                + b_ref[...]).astype(o_ref.dtype)


# ----------------------------- wrappers -----------------------------

def _stacked_spec(w):
    """Per-layer weight (leading L axis): block (1, ...) indexed by layer."""
    nd = w.ndim
    return pl.BlockSpec((1,) + w.shape[1:],
                        lambda b, l, _n=nd: (l,) + (0,) * (_n - 1))


def _shared_spec(w):
    """Layer-independent parameter: whole array, constant block index."""
    nd = w.ndim
    return pl.BlockSpec(w.shape, lambda b, l, _n=nd: (0,) * _n)


def run_encoder(x, mask, stack, fna, fnb, heads):
    B, S, D = x.shape
    L = stack['n1a'].shape[0]
    ws = [stack[n] for n in ENC_NAMES]
    in_specs = ([pl.BlockSpec((1, S, D), lambda b, l: (b, 0, 0)),
                 pl.BlockSpec((1, 1, S), lambda b, l: (b, 0, 0))]
                + [_stacked_spec(w) for w in ws]
                + [_shared_spec(fna), _shared_spec(fnb)])
    return pl.pallas_call(
        functools.partial(encoder_stack_kernel, heads=heads),
        out_shape=jax.ShapeDtypeStruct((B, S, D), jnp.float32),
        grid=(B, L),
        in_specs=in_specs,
        out_specs=pl.BlockSpec((1, S, D), lambda b, l: (b, 0, 0)),
        scratch_shapes=[pltpu.VMEM((S, D), jnp.float32)],
        compiler_params=pltpu.CompilerParams(
            dimension_semantics=("parallel", "arbitrary"),
            vmem_limit_bytes=VMEM_LIMIT_BYTES),
    )(x, mask, *ws, fna, fnb)


def run_decoder(x, e_out, src_mask, trg_mask, stack, fna, fnb, heads):
    B, St, D = x.shape
    Ss = e_out.shape[1]
    L = stack['n1a'].shape[0]
    ws = [stack[n] for n in DEC_NAMES]
    in_specs = ([pl.BlockSpec((1, St, D), lambda b, l: (b, 0, 0)),
                 pl.BlockSpec((1, Ss, D), lambda b, l: (b, 0, 0)),
                 pl.BlockSpec((1, 1, Ss), lambda b, l: (b, 0, 0)),
                 pl.BlockSpec((1, St, St), lambda b, l: (b, 0, 0))]
                + [_stacked_spec(w) for w in ws]
                + [_shared_spec(fna), _shared_spec(fnb)])
    return pl.pallas_call(
        functools.partial(decoder_stack_kernel, heads=heads),
        out_shape=jax.ShapeDtypeStruct((B, St, D), jnp.float32),
        grid=(B, L),
        in_specs=in_specs,
        out_specs=pl.BlockSpec((1, St, D), lambda b, l: (b, 0, 0)),
        scratch_shapes=[pltpu.VMEM((St, D), jnp.float32)],
        compiler_params=pltpu.CompilerParams(
            dimension_semantics=("parallel", "arbitrary"),
            vmem_limit_bytes=VMEM_LIMIT_BYTES),
    )(x, e_out, src_mask, trg_mask, *ws, fna, fnb)


def run_out_proj(x, w, b):
    B, S, D = x.shape
    V = w.shape[1]
    return pl.pallas_call(
        out_proj_kernel,
        out_shape=jax.ShapeDtypeStruct((B, S, V), jnp.float32),
        grid=(B,),
        in_specs=[pl.BlockSpec((1, S, D), lambda i: (i, 0, 0)),
                  pl.BlockSpec(w.shape, lambda i: (0, 0)),
                  pl.BlockSpec(b.shape, lambda i: (0, 0))],
        out_specs=pl.BlockSpec((1, S, V), lambda i: (i, 0, 0)),
        compiler_params=pltpu.CompilerParams(
            dimension_semantics=("parallel",),
            vmem_limit_bytes=VMEM_LIMIT_BYTES),
    )(x, w, b)


def positional_encoding(max_len, d_model):
    # Matches the reference PositionalEncoder table.
    pos = jnp.arange(max_len, dtype=jnp.float32)[:, None]
    i_even = jnp.arange(0, d_model, 2, dtype=jnp.float32)[None, :]
    pe = jnp.zeros((max_len, d_model), jnp.float32)
    pe = pe.at[:, 0::2].set(jnp.sin(pos / jnp.power(10000.0, (2.0 * i_even) / d_model)))
    pe = pe.at[:, 1::2].set(jnp.cos(pos / jnp.power(10000.0, (2.0 * (i_even + 1.0)) / d_model)))
    return pe


# ----------------------------- parameters -----------------------------

def init_params(key, src_vocab, trg_vocab, d_model, n_layers, heads, d_ff):
    dh = d_model // heads
    q_scale = 1.0 / math.sqrt(dh)      # folded into the Q projections
    counter = [0]

    def nk():
        counter[0] += 1
        return jax.random.fold_in(key, counter[0])

    def lin(fan_in, fan_out, scale=1.0):
        w = jax.random.normal(nk(), (fan_in, fan_out), jnp.float32) / math.sqrt(fan_in)
        b = jnp.zeros((1, fan_out), jnp.float32)
        return w * scale, b * scale

    ones = lambda: jnp.ones((1, d_model), jnp.float32)
    zeros = lambda: jnp.zeros((1, d_model), jnp.float32)

    def enc_layer():
        wq, bq = lin(d_model, d_model, q_scale)
        wk, bk = lin(d_model, d_model)
        wv, bv = lin(d_model, d_model)
        wo, bo = lin(d_model, d_model)
        w1, b1 = lin(d_model, d_ff)
        w2, b2 = lin(d_ff, d_model)
        return dict(
            n1a=ones(), n1b=zeros(),
            wqkv=jnp.concatenate([wq, wk, wv], 1).astype(jnp.bfloat16),
            bqkv=jnp.concatenate([bq, bk, bv], 1),
            wo=wo.astype(jnp.bfloat16), bo=bo,
            n2a=ones(), n2b=zeros(),
            w1=w1.astype(jnp.bfloat16), b1=b1,
            w2=w2.astype(jnp.bfloat16), b2=b2)

    def dec_layer():
        wq1, bq1 = lin(d_model, d_model, q_scale)
        wk1, bk1 = lin(d_model, d_model)
        wv1, bv1 = lin(d_model, d_model)
        wo1, bo1 = lin(d_model, d_model)
        wq2, bq2 = lin(d_model, d_model, q_scale)
        wk2, bk2 = lin(d_model, d_model)
        wv2, bv2 = lin(d_model, d_model)
        wo2, bo2 = lin(d_model, d_model)
        w1, b1 = lin(d_model, d_ff)
        w2, b2 = lin(d_ff, d_model)
        return dict(
            n1a=ones(), n1b=zeros(),
            wqkv=jnp.concatenate([wq1, wk1, wv1], 1).astype(jnp.bfloat16),
            bqkv=jnp.concatenate([bq1, bk1, bv1], 1),
            wo1=wo1.astype(jnp.bfloat16), bo1=bo1,
            n2a=ones(), n2b=zeros(),
            wq2=wq2.astype(jnp.bfloat16), bq2=bq2,
            wkv2=jnp.concatenate([wk2, wv2], 1).astype(jnp.bfloat16),
            bkv2=jnp.concatenate([bk2, bv2], 1),
            wo2=wo2.astype(jnp.bfloat16), bo2=bo2,
            n3a=ones(), n3b=zeros(),
            w1=w1.astype(jnp.bfloat16), b1=b1,
            w2=w2.astype(jnp.bfloat16), b2=b2)

    enc_layers = [enc_layer() for _ in range(n_layers)]
    dec_layers = [dec_layer() for _ in range(n_layers)]
    enc = {k: jnp.stack([lyr[k] for lyr in enc_layers]) for k in ENC_NAMES}
    dec = {k: jnp.stack([lyr[k] for lyr in dec_layers]) for k in DEC_NAMES}

    w_out, b_out = lin(d_model, trg_vocab)
    # TODO(synk): pretrained word_emb / torchtext `field` vocab loading is not
    # replicated; embeddings are randomly initialized here.
    return dict(
        emb_src=jax.random.normal(nk(), (src_vocab, d_model), jnp.float32) * 0.02,
        emb_trg=jax.random.normal(nk(), (trg_vocab, d_model), jnp.float32) * 0.02,
        enc=enc, enc_na=ones(), enc_nb=zeros(),
        dec=dec, dec_na=ones(), dec_nb=zeros(),
        w_out=w_out.astype(jnp.bfloat16), b_out=b_out)


# ----------------------------- forward -----------------------------

def transformer_forward(src, trg, src_mask, trg_mask, params, heads):
    """Transformer.forward: encoder -> decoder -> out linear."""
    D = params['emb_src'].shape[1]
    sqrt_d = math.sqrt(D)
    # Embedder + PositionalEncoder (gather + add: plain-JAX glue; dropout=identity).
    xs = params['emb_src'][src] * sqrt_d + positional_encoding(src.shape[1], D)[None]
    e_outputs = run_encoder(xs, src_mask, params['enc'],
                            params['enc_na'], params['enc_nb'], heads)
    xt = params['emb_trg'][trg] * sqrt_d + positional_encoding(trg.shape[1], D)[None]
    # TODO(synk): `decoder_extra_layers` clones beyond N are never run in the
    # reference forward (loop is range(N)), so they are not materialized here.
    d_output = run_decoder(xt, e_outputs, src_mask, trg_mask, params['dec'],
                           params['dec_na'], params['dec_nb'], heads)
    return run_out_proj(d_output, params['w_out'], params['b_out'])


if __name__ == "__main__":
    key = jax.random.PRNGKey(0)
    # Small but lane-dense shapes (d_model and trg_vocab multiples of 128).
    src_vocab, trg_vocab = 100, 128
    d_model, n_layers, heads, d_ff = 128, 2, 4, 256
    B, Ss, St = 2, 8, 8

    k_src, k_trg, k_par = jax.random.split(key, 3)
    src = jax.random.randint(k_src, (B, Ss), 0, src_vocab)
    trg = jax.random.randint(k_trg, (B, St), 0, trg_vocab)

    # src_mask: (B, 1, S_src); 1 = attend, 0 = masked (last 2 keys of batch 1).
    src_mask = jnp.ones((B, 1, Ss), jnp.float32).at[1, 0, Ss - 2:].set(0.0)
    # trg_mask: (B, S_trg, S_trg) = padding mask AND causal no-peek mask.
    causal = jnp.tril(jnp.ones((St, St), jnp.float32))
    trg_pad = jnp.ones((B, 1, St), jnp.float32).at[1, 0, St - 1:].set(0.0)
    trg_mask = trg_pad * causal[None, :, :]

    params = init_params(k_par, src_vocab, trg_vocab, d_model, n_layers, heads, d_ff)

    out = transformer_forward(src, trg, src_mask, trg_mask, params, heads)
    out = jax.block_until_ready(out)

    assert out.shape == (B, St, trg_vocab), out.shape
    assert bool(jnp.all(jnp.isfinite(out)))
    print("KERNEL_OK")
</pallas_src>

<mosaic_0001>
module attributes {stable_mosaic.version = 11 : i64} {
  func.func @encoder_stack_kernel(%arg0: i32, %arg1: i32, %arg2: memref<1x8x128xf32, #tpu.memory_space<vmem>>, %arg3: memref<1x1x8xf32, #tpu.memory_space<vmem>>, %arg4: memref<1x1x128xf32, #tpu.memory_space<vmem>>, %arg5: memref<1x1x128xf32, #tpu.memory_space<vmem>>, %arg6: memref<1x128x384xbf16, #tpu.memory_space<vmem>>, %arg7: memref<1x1x384xf32, #tpu.memory_space<vmem>>, %arg8: memref<1x128x128xbf16, #tpu.memory_space<vmem>>, %arg9: memref<1x1x128xf32, #tpu.memory_space<vmem>>, %arg10: memref<1x1x128xf32, #tpu.memory_space<vmem>>, %arg11: memref<1x1x128xf32, #tpu.memory_space<vmem>>, %arg12: memref<1x128x256xbf16, #tpu.memory_space<vmem>>, %arg13: memref<1x1x256xf32, #tpu.memory_space<vmem>>, %arg14: memref<1x256x128xbf16, #tpu.memory_space<vmem>>, %arg15: memref<1x1x128xf32, #tpu.memory_space<vmem>>, %arg16: memref<1x128xf32, #tpu.memory_space<vmem>>, %arg17: memref<1x128xf32, #tpu.memory_space<vmem>>, %arg18: memref<1x8x128xf32, #tpu.memory_space<vmem>>, %arg19: memref<8x128xf32, #tpu.memory_space<vmem>>) attributes {dimension_semantics = [#tpu.dimension_semantics<parallel>, #tpu.dimension_semantics<arbitrary>], iteration_bounds = array<i64: 2, 2>, scalar_prefetch = 0 : i64, scratch_operands = 1 : i64, tpu.core_type = #tpu.core_type<tc>, window_params = [{transform_indices = @transform_0, window_bounds = array<i64: 1, 8, 128>}, {transform_indices = @transform_1, window_bounds = array<i64: 1, 1, 8>}, {transform_indices = @transform_2, window_bounds = array<i64: 1, 1, 128>}, {transform_indices = @transform_3, window_bounds = array<i64: 1, 1, 128>}, {transform_indices = @transform_4, window_bounds = array<i64: 1, 128, 384>}, {transform_indices = @transform_5, window_bounds = array<i64: 1, 1, 384>}, {transform_indices = @transform_6, window_bounds = array<i64: 1, 128, 128>}, {transform_indices = @transform_7, window_bounds = array<i64: 1, 1, 128>}, {transform_indices = @transform_8, window_bounds = array<i64: 1, 1, 128>}, {transform_indices = @transform_9, window_bounds = array<i64: 1, 1, 128>}, {transform_indices = @transform_10, window_bounds = array<i64: 1, 128, 256>}, {transform_indices = @transform_11, window_bounds = array<i64: 1, 1, 256>}, {transform_indices = @transform_12, window_bounds = array<i64: 1, 256, 128>}, {transform_indices = @transform_13, window_bounds = array<i64: 1, 1, 128>}, {pipeline_mode = #tpu.pipeline_mode<synchronous>, transform_indices = @transform_14, window_bounds = array<i64: 1, 128>}, {pipeline_mode = #tpu.pipeline_mode<synchronous>, transform_indices = @transform_15, window_bounds = array<i64: 1, 128>}, {transform_indices = @transform_16, window_bounds = array<i64: 1, 8, 128>}]} {
    %c0_i32 = arith.constant 0 : i32
    %0 = arith.cmpi eq, %arg1, %c0_i32 : i32
    %1 = arith.extui %0 : i1 to i32
    %c0_i32_0 = arith.constant 0 : i32
    %2 = arith.cmpi ne, %1, %c0_i32_0 : i32
    scf.if %2 {
      %c0_86 = arith.constant 0 : index
      %c0_87 = arith.constant 0 : index
      %c0_88 = arith.constant 0 : index
      %216 = vector.load %arg2[%c0_86, %c0_87, %c0_88] : memref<1x8x128xf32, #tpu.memory_space<vmem>>, vector<1x8x128xf32>
      %217 = vector.shape_cast %216 : vector<1x8x128xf32> to vector<8x128xf32>
      %c0_89 = arith.constant 0 : index
      %c0_90 = arith.constant 0 : index
      %218 = vector.load %arg19[%c0_89, %c0_90] : memref<8x128xf32, #tpu.memory_space<vmem>>, vector<8x128xf32>
      tpu.vector_store %arg19[%c0_89, %c0_90], %217 {strides = array<i32>} : memref<8x128xf32, #tpu.memory_space<vmem>>, vector<8x128xf32>,
    } else {
    }
    %c0 = arith.constant 0 : index
    %c0_1 = arith.constant 0 : index
    %3 = vector.load %arg19[%c0, %c0_1] : memref<8x128xf32, #tpu.memory_space<vmem>>, vector<8x128xf32>
    %c0_2 = arith.constant 0 : index
    %c0_3 = arith.constant 0 : index
    %c0_4 = arith.constant 0 : index
    %4 = vector.load %arg3[%c0_2, %c0_3, %c0_4] : memref<1x1x8xf32, #tpu.memory_space<vmem>>, vector<1x1x8xf32>
    %5 = vector.shape_cast %4 : vector<1x1x8xf32> to vector<1x8xf32>
    %c0_5 = arith.constant 0 : index
    %c0_6 = arith.constant 0 : index
    %c0_7 = arith.constant 0 : index
    %6 = vector.load %arg4[%c0_5, %c0_6, %c0_7] : memref<1x1x128xf32, #tpu.memory_space<vmem>>, vector<1x1x128xf32>
    %7 = vector.shape_cast %6 : vector<1x1x128xf32> to vector<1x128xf32>
    %c0_8 = arith.constant 0 : index
    %c0_9 = arith.constant 0 : index
    %c0_10 = arith.constant 0 : index
    %8 = vector.load %arg5[%c0_8, %c0_9, %c0_10] : memref<1x1x128xf32, #tpu.memory_space<vmem>>, vector<1x1x128xf32>
    %9 = vector.shape_cast %8 : vector<1x1x128xf32> to vector<1x128xf32>
    %cst = arith.constant dense<0.000000e+00> : vector<8xf32>
    %10 = vector.multi_reduction <add>, %3, %cst [1] : vector<8x128xf32> to vector<8xf32>
    %11 = vector.shape_cast %10 : vector<8xf32> to vector<8x1xf32>
    %cst_11 = arith.constant 1.280000e+02 : f32
    %12 = vector.broadcast %cst_11 : f32 to vector<8x1xf32>
    %13 = arith.divf %11, %12 : vector<8x1xf32>
    %14 = vector.broadcast %13 : vector<8x1xf32> to vector<8x128xf32>
    %15 = arith.subf %3, %14 : vector<8x128xf32>
    %16 = arith.mulf %15, %15 : vector<8x128xf32>
    %cst_12 = arith.constant dense<0.000000e+00> : vector<8xf32>
    %17 = vector.multi_reduction <add>, %16, %cst_12 [1] : vector<8x128xf32> to vector<8xf32>
    %18 = vector.shape_cast %17 : vector<8xf32> to vector<8x1xf32>
    %cst_13 = arith.constant 1.270000e+02 : f32
    %19 = vector.broadcast %cst_13 : f32 to vector<8x1xf32>
    %20 = arith.divf %18, %19 : vector<8x1xf32>
    %21 = vector.broadcast %13 : vector<8x1xf32> to vector<8x128xf32>
    %22 = arith.subf %3, %21 : vector<8x128xf32>
    %23 = vector.broadcast %7 : vector<1x128xf32> to vector<8x128xf32>
    %24 = arith.mulf %23, %22 : vector<8x128xf32>
    %25 = math.sqrt %20 : vector<8x1xf32>
    %cst_14 = arith.constant 9.99999997E-7 : f32
    %26 = vector.broadcast %cst_14 : f32 to vector<8x1xf32>
    %27 = arith.addf %25, %26 : vector<8x1xf32>
    %28 = vector.broadcast %27 : vector<8x1xf32> to vector<8x128xf32>
    %29 = arith.divf %24, %28 : vector<8x128xf32>
    %30 = vector.broadcast %9 : vector<1x128xf32> to vector<8x128xf32>
    %31 = arith.addf %29, %30 : vector<8x128xf32>
    %32 = arith.truncf %31 : vector<8x128xf32> to vector<8x128xbf16>
    %c0_15 = arith.constant 0 : index
    %c0_16 = arith.constant 0 : index
    %c0_17 = arith.constant 0 : index
    %33 = vector.load %arg6[%c0_15, %c0_16, %c0_17] : memref<1x128x384xbf16, #tpu.memory_space<vmem>>, vector<1x128x384xbf16>
    %34 = vector.shape_cast %33 : vector<1x128x384xbf16> to vector<128x384xbf16>
    %cst_18 = arith.constant dense<0.000000e+00> : vector<8x384xf32>
    %35 = tpu.matmul %32, %34, %cst_18 {dimension_numbers = #tpu.dot_dimension_numbers<[1], [0], [0], [1], [0, 0, 1, 1], [], []>} : vector<8x128xbf16>, vector<128x384xbf16>, vector<8x384xf32> -> vector<8x384xf32>
    %c0_19 = arith.constant 0 : index
    %c0_20 = arith.constant 0 : index
    %c0_21 = arith.constant 0 : index
    %36 = vector.load %arg7[%c0_19, %c0_20, %c0_21] : memref<1x1x384xf32, #tpu.memory_space<vmem>>, vector<1x1x384xf32>
    %37 = vector.shape_cast %36 : vector<1x1x384xf32> to vector<1x384xf32>
    %38 = vector.broadcast %37 : vector<1x384xf32> to vector<8x384xf32>
    %39 = arith.addf %35, %38 : vector<8x384xf32>
    %40 = vector.extract_strided_slice %39 {offsets = [0, 0], sizes = [8, 128], strides = [1, 1]} : vector<8x384xf32> to vector<8x128xf32>
    %41 = vector.extract_strided_slice %39 {offsets = [0, 128], sizes = [8, 128], strides = [1, 1]} : vector<8x384xf32> to vector<8x128xf32>
    %42 = vector.extract_strided_slice %39 {offsets = [0, 256], sizes = [8, 128], strides = [1, 1]} : vector<8x384xf32> to vector<8x128xf32>
    %c0_22 = arith.constant 0 : index
    %c0_23 = arith.constant 0 : index
    %c0_24 = arith.constant 0 : index
    %43 = vector.load %arg8[%c0_22, %c0_23, %c0_24] : memref<1x128x128xbf16, #tpu.memory_space<vmem>>, vector<1x128x128xbf16>
    %44 = vector.shape_cast %43 : vector<1x128x128xbf16> to vector<128x128xbf16>
    %c0_25 = arith.constant 0 : index
    %c0_26 = arith.constant 0 : index
    %c0_27 = arith.constant 0 : index
    %45 = vector.load %arg9[%c0_25, %c0_26, %c0_27] : memref<1x1x128xf32, #tpu.memory_space<vmem>>, vector<1x1x128xf32>
    %46 = vector.shape_cast %45 : vector<1x1x128xf32> to vector<1x128xf32>
    %cst_28 = arith.constant 0.000000e+00 : f32
    %47 = vector.broadcast %cst_28 : f32 to vector<8x128xf32>
    %48 = vector.extract_strided_slice %40 {offsets = [0, 0], sizes = [8, 32], strides = [1, 1]} : vector<8x128xf32> to vector<8x32xf32>
    %49 = arith.truncf %48 : vector<8x32xf32> to vector<8x32xbf16>
    %50 = vector.extract_strided_slice %41 {offsets = [0, 0], sizes = [8, 32], strides = [1, 1]} : vector<8x128xf32> to vector<8x32xf32>
    %51 = arith.truncf %50 : vector<8x32xf32> to vector<8x32xbf16>
    %52 = vector.extract_strided_slice %42 {offsets = [0, 0], sizes = [8, 32], strides = [1, 1]} : vector<8x128xf32> to vector<8x32xf32>
    %53 = arith.truncf %52 : vector<8x32xf32> to vector<8x32xbf16>
    "tpu.trace_start"() <{level = 10 : i32, message = "qd,kd->qk"}> : () -> ()
    %cst_29 = arith.constant dense<0.000000e+00> : vector<8x8xf32>
    %54 = tpu.matmul %49, %51, %cst_29 {dimension_numbers = #tpu.dot_dimension_numbers<[1], [1], [0], [0], [0, 0, 1, 0], [], []>} : vector<8x32xbf16>, vector<8x32xbf16>, vector<8x8xf32> -> vector<8x8xf32>
    %cst_30 = arith.constant 0.000000e+00 : f32
    "tpu.trace_stop"() : () -> ()
    %55 = vector.broadcast %cst_30 : f32 to vector<1x8xf32>
    %56 = arith.cmpf oeq, %5, %55 : vector<1x8xf32>
    %cst_31 = arith.constant -1.000000e+09 : f32
    %57 = vector.shape_cast %56 : vector<1x8xi1> to vector<1x8xi1>
    %58 = vector.broadcast %57 : vector<1x8xi1> to vector<8x8xi1>
    %59 = vector.broadcast %cst_31 : f32 to vector<8x8xf32>
    %60 = arith.select %58, %59, %54 : vector<8x8xi1>, vector<8x8xf32>
    %cst_32 = arith.constant dense<0xFF800000> : vector<8xf32>
    %61 = vector.multi_reduction <maximumf>, %60, %cst_32 [1] : vector<8x8xf32> to vector<8xf32>
    %62 = vector.shape_cast %61 : vector<8xf32> to vector<8x1xf32>
    %63 = vector.broadcast %62 : vector<8x1xf32> to vector<8x8xf32>
    %64 = arith.subf %60, %63 : vector<8x8xf32>
    %65 = math.exp %64 : vector<8x8xf32>
    %cst_33 = arith.constant dense<0.000000e+00> : vector<8xf32>
    %66 = vector.multi_reduction <add>, %65, %cst_33 [1] : vector<8x8xf32> to vector<8xf32>
    %67 = vector.shape_cast %66 : vector<8xf32> to vector<8x1xf32>
    %68 = tpu.reciprocal %67 {approx = true} : vector<8x1xf32> -> vector<8x1xf32>
    %69 = vector.broadcast %68 : vector<8x1xf32> to vector<8x8xf32>
    %70 = arith.mulf %65, %69 : vector<8x8xf32>
    %71 = arith.truncf %70 : vector<8x8xf32> to vector<8x8xbf16>
    %cst_34 = arith.constant dense<0.000000e+00> : vector<8x32xf32>
    %72 = tpu.matmul %71, %53, %cst_34 {dimension_numbers = #tpu.dot_dimension_numbers<[1], [0], [0], [1], [0, 0, 1, 1], [], []>} : vector<8x8xbf16>, vector<8x32xbf16>, vector<8x32xf32> -> vector<8x32xf32>
    %73 = arith.truncf %72 : vector<8x32xf32> to vector<8x32xbf16>
    %74 = vector.extract_strided_slice %44 {offsets = [0, 0], sizes = [32, 128], strides = [1, 1]} : vector<128x128xbf16> to vector<32x128xbf16>
    %cst_35 = arith.constant dense<0.000000e+00> : vector<8x128xf32>
    %75 = tpu.matmul %73, %74, %cst_35 {dimension_numbers = #tpu.dot_dimension_numbers<[1], [0], [0], [1], [0, 0, 1, 1], [], []>} : vector<8x32xbf16>, vector<32x128xbf16>, vector<8x128xf32> -> vector<8x128xf32>
    %76 = arith.addf %47, %75 : vector<8x128xf32>
    %77 = vector.extract_strided_slice %40 {offsets = [0, 32], sizes = [8, 32], strides = [1, 1]} : vector<8x128xf32> to vector<8x32xf32>
    %78 = arith.truncf %77 : vector<8x32xf32> to vector<8x32xbf16>
    %79 = vector.extract_strided_slice %41 {offsets = [0, 32], sizes = [8, 32], strides = [1, 1]} : vector<8x128xf32> to vector<8x32xf32>
    %80 = arith.truncf %79 : vector<8x32xf32> to vector<8x32xbf16>
    %81 = vector.extract_strided_slice %42 {offsets = [0, 32], sizes = [8, 32], strides = [1, 1]} : vector<8x128xf32> to vector<8x32xf32>
    %82 = arith.truncf %81 : vector<8x32xf32> to vector<8x32xbf16>
    "tpu.trace_start"() <{level = 10 : i32, message = "qd,kd->qk"}> : () -> ()
    %cst_36 = arith.constant dense<0.000000e+00> : vector<8x8xf32>
    %83 = tpu.matmul %78, %80, %cst_36 {dimension_numbers = #tpu.dot_dimension_numbers<[1], [1], [0], [0], [0, 0, 1, 0], [], []>} : vector<8x32xbf16>, vector<8x32xbf16>, vector<8x8xf32> -> vector<8x8xf32>
    %cst_37 = arith.constant 0.000000e+00 : f32
    "tpu.trace_stop"() : () -> ()
    %84 = vector.broadcast %cst_37 : f32 to vector<1x8xf32>
    %85 = arith.cmpf oeq, %5, %84 : vector<1x8xf32>
    %cst_38 = arith.constant -1.000000e+09 : f32
    %86 = vector.shape_cast %85 : vector<1x8xi1> to vector<1x8xi1>
    %87 = vector.broadcast %86 : vector<1x8xi1> to vector<8x8xi1>
    %88 = vector.broadcast %cst_38 : f32 to vector<8x8xf32>
    %89 = arith.select %87, %88, %83 : vector<8x8xi1>, vector<8x8xf32>
    %cst_39 = arith.constant dense<0xFF800000> : vector<8xf32>
    %90 = vector.multi_reduction <maximumf>, %89, %cst_39 [1] : vector<8x8xf32> to vector<8xf32>
    %91 = vector.shape_cast %90 : vector<8xf32> to vector<8x1xf32>
    %92 = vector.broadcast %91 : vector<8x1xf32> to vector<8x8xf32>
    %93 = arith.subf %89, %92 : vector<8x8xf32>
    %94 = math.exp %93 : vector<8x8xf32>
    %cst_40 = arith.constant dense<0.000000e+00> : vector<8xf32>
    %95 = vector.multi_reduction <add>, %94, %cst_40 [1] : vector<8x8xf32> to vector<8xf32>
    %96 = vector.shape_cast %95 : vector<8xf32> to vector<8x1xf32>
    %97 = tpu.reciprocal %96 {approx = true} : vector<8x1xf32> -> vector<8x1xf32>
    %98 = vector.broadcast %97 : vector<8x1xf32> to vector<8x8xf32>
    %99 = arith.mulf %94, %98 : vector<8x8xf32>
    %100 = arith.truncf %99 : vector<8x8xf32> to vector<8x8xbf16>
    %cst_41 = arith.constant dense<0.000000e+00> : vector<8x32xf32>
    %101 = tpu.matmul %100, %82, %cst_41 {dimension_numbers = #tpu.dot_dimension_numbers<[1], [0], [0], [1], [0, 0, 1, 1], [], []>} : vector<8x8xbf16>, vector<8x32xbf16>, vector<8x32xf32> -> vector<8x32xf32>
    %102 = arith.truncf %101 : vector<8x32xf32> to vector<8x32xbf16>
    %103 = vector.extract_strided_slice %44 {offsets = [32, 0], sizes = [32, 128], strides = [1, 1]} : vector<128x128xbf16> to vector<32x128xbf16>
    %cst_42 = arith.constant dense<0.000000e+00> : vector<8x128xf32>
    %104 = tpu.matmul %102, %103, %cst_42 {dimension_numbers = #tpu.dot_dimension_numbers<[1], [0], [0], [1], [0, 0, 1, 1], [], []>} : vector<8x32xbf16>, vector<32x128xbf16>, vector<8x128xf32> -> vector<8x128xf32>
    %105 = arith.addf %76, %104 : vector<8x128xf32>
    %106 = vector.extract_strided_slice %40 {offsets = [0, 64], sizes = [8, 32], strides = [1, 1]} : vector<8x128xf32> to vector<8x32xf32>
    %107 = arith.truncf %106 : vector<8x32xf32> to vector<8x32xbf16>
    %108 = vector.extract_strided_slice %41 {offsets = [0, 64], sizes = [8, 32], strides = [1, 1]} : vector<8x128xf32> to vector<8x32xf32>
    %109 = arith.truncf %108 : vector<8x32xf32> to vector<8x32xbf16>
    %110 = vector.extract_strided_slice %42 {offsets = [0, 64], sizes = [8, 32], strides = [1, 1]} : vector<8x128xf32> to vector<8x32xf32>
    %111 = arith.truncf %110 : vector<8x32xf32> to vector<8x32xbf16>
    "tpu.trace_start"() <{level = 10 : i32, message = "qd,kd->qk"}> : () -> ()
    %cst_43 = arith.constant dense<0.000000e+00> : vector<8x8xf32>
    %112 = tpu.matmul %107, %109, %cst_43 {dimension_numbers = #tpu.dot_dimension_numbers<[1], [1], [0], [0], [0, 0, 1, 0], [], []>} : vector<8x32xbf16>, vector<8x32xbf16>, vector<8x8xf32> -> vector<8x8xf32>
    %cst_44 = arith.constant 0.000000e+00 : f32
    "tpu.trace_stop"() : () -> ()
    %113 = vector.broadcast %cst_44 : f32 to vector<1x8xf32>
    %114 = arith.cmpf oeq, %5, %113 : vector<1x8xf32>
    %cst_45 = arith.constant -1.000000e+09 : f32
    %115 = vector.shape_cast %114 : vector<1x8xi1> to vector<1x8xi1>
    %116 = vector.broadcast %115 : vector<1x8xi1> to vector<8x8xi1>
    %117 = vector.broadcast %cst_45 : f32 to vector<8x8xf32>
    %118 = arith.select %116, %117, %112 : vector<8x8xi1>, vector<8x8xf32>
    %cst_46 = arith.constant dense<0xFF800000> : vector<8xf32>
    %119 = vector.multi_reduction <maximumf>, %118, %cst_46 [1] : vector<8x8xf32> to vector<8xf32>
    %120 = vector.shape_cast %119 : vector<8xf32> to vector<8x1xf32>
    %121 = vector.broadcast %120 : vector<8x1xf32> to vector<8x8xf32>
    %122 = arith.subf %118, %121 : vector<8x8xf32>
    %123 = math.exp %122 : vector<8x8xf32>
    %cst_47 = arith.constant dense<0.000000e+00> : vector<8xf32>
    %124 = vector.multi_reduction <add>, %123, %cst_47 [1] : vector<8x8xf32> to vector<8xf32>
    %125 = vector.shape_cast %124 : vector<8xf32> to vector<8x1xf32>
    %126 = tpu.reciprocal %125 {approx = true} : vector<8x1xf32> -> vector<8x1xf32>
    %127 = vector.broadcast %126 : vector<8x1xf32> to vector<8x8xf32>
    %128 = arith.mulf %123, %127 : vector<8x8xf32>
    %129 = arith.truncf %128 : vector<8x8xf32> to vector<8x8xbf16>
    %cst_48 = arith.constant dense<0.000000e+00> : vector<8x32xf32>
    %130 = tpu.matmul %129, %111, %cst_48 {dimension_numbers = #tpu.dot_dimension_numbers<[1], [0], [0], [1], [0, 0, 1, 1], [], []>} : vector<8x8xbf16>, vector<8x32xbf16>, vector<8x32xf32> -> vector<8x32xf32>
    %131 = arith.truncf %130 : vector<8x32xf32> to vector<8x32xbf16>
    %132 = vector.extract_strided_slice %44 {offsets = [64, 0], sizes = [32, 128], strides = [1, 1]} : vector<128x128xbf16> to vector<32x128xbf16>
    %cst_49 = arith.constant dense<0.000000e+00> : vector<8x128xf32>
    %133 = tpu.matmul %131, %132, %cst_49 {dimension_numbers = #tpu.dot_dimension_numbers<[1], [0], [0], [1], [0, 0, 1, 1], [], []>} : vector<8x32xbf16>, vector<32x128xbf16>, vector<8x128xf32> -> vector<8x128xf32>
    %134 = arith.addf %105, %133 : vector<8x128xf32>
    %135 = vector.extract_strided_slice %40 {offsets = [0, 96], sizes = [8, 32], strides = [1, 1]} : vector<8x128xf32> to vector<8x32xf32>
    %136 = arith.truncf %135 : vector<8x32xf32> to vector<8x32xbf16>
    %137 = vector.extract_strided_slice %41 {offsets = [0, 96], sizes = [8, 32], strides = [1, 1]} : vector<8x128xf32> to vector<8x32xf32>
    %138 = arith.truncf %137 : vector<8x32xf32> to vector<8x32xbf16>
    %139 = vector.extract_strided_slice %42 {offsets = [0, 96], sizes = [8, 32], strides = [1, 1]} : vector<8x128xf32> to vector<8x32xf32>
    %140 = arith.truncf %139 : vector<8x32xf32> to vector<8x32xbf16>
    "tpu.trace_start"() <{level = 10 : i32, message = "qd,kd->qk"}> : () -> ()
    %cst_50 = arith.constant dense<0.000000e+00> : vector<8x8xf32>
    %141 = tpu.matmul %136, %138, %cst_50 {dimension_numbers = #tpu.dot_dimension_numbers<[1], [1], [0], [0], [0, 0, 1, 0], [], []>} : vector<8x32xbf16>, vector<8x32xbf16>, vector<8x8xf32> -> vector<8x8xf32>
    %cst_51 = arith.constant 0.000000e+00 : f32
    "tpu.trace_stop"() : () -> ()
    %142 = vector.broadcast %cst_51 : f32 to vector<1x8xf32>
    %143 = arith.cmpf oeq, %5, %142 : vector<1x8xf32>
    %cst_52 = arith.constant -1.000000e+09 : f32
    %144 = vector.shape_cast %143 : vector<1x8xi1> to vector<1x8xi1>
    %145 = vector.broadcast %144 : vector<1x8xi1> to vector<8x8xi1>
    %146 = vector.broadcast %cst_52 : f32 to vector<8x8xf32>
    %147 = arith.select %145, %146, %141 : vector<8x8xi1>, vector<8x8xf32>
    %cst_53 = arith.constant dense<0xFF800000> : vector<8xf32>
    %148 = vector.multi_reduction <maximumf>, %147, %cst_53 [1] : vector<8x8xf32> to vector<8xf32>
    %149 = vector.shape_cast %148 : vector<8xf32> to vector<8x1xf32>
    %150 = vector.broadcast %149 : vector<8x1xf32> to vector<8x8xf32>
    %151 = arith.subf %147, %150 : vector<8x8xf32>
    %152 = math.exp %151 : vector<8x8xf32>
    %cst_54 = arith.constant dense<0.000000e+00> : vector<8xf32>
    %153 = vector.multi_reduction <add>, %152, %cst_54 [1] : vector<8x8xf32> to vector<8xf32>
    %154 = vector.shape_cast %153 : vector<8xf32> to vector<8x1xf32>
    %155 = tpu.reciprocal %154 {approx = true} : vector<8x1xf32> -> vector<8x1xf32>
    %156 = vector.broadcast %155 : vector<8x1xf32> to vector<8x8xf32>
    %157 = arith.mulf %152, %156 : vector<8x8xf32>
    %158 = arith.truncf %157 : vector<8x8xf32> to vector<8x8xbf16>
    %cst_55 = arith.constant dense<0.000000e+00> : vector<8x32xf32>
    %159 = tpu.matmul %158, %140, %cst_55 {dimension_numbers = #tpu.dot_dimension_numbers<[1], [0], [0], [1], [0, 0, 1, 1], [], []>} : vector<8x8xbf16>, vector<8x32xbf16>, vector<8x32xf32> -> vector<8x32xf32>
    %160 = arith.truncf %159 : vector<8x32xf32> to vector<8x32xbf16>
    %161 = vector.extract_strided_slice %44 {offsets = [96, 0], sizes = [32, 128], strides = [1, 1]} : vector<128x128xbf16> to vector<32x128xbf16>
    %cst_56 = arith.constant dense<0.000000e+00> : vector<8x128xf32>
    %162 = tpu.matmul %160, %161, %cst_56 {dimension_numbers = #tpu.dot_dimension_numbers<[1], [0], [0], [1], [0, 0, 1, 1], [], []>} : vector<8x32xbf16>, vector<32x128xbf16>, vector<8x128xf32> -> vector<8x128xf32>
    %163 = arith.addf %134, %162 : vector<8x128xf32>
    %164 = vector.broadcast %46 : vector<1x128xf32> to vector<8x128xf32>
    %165 = arith.addf %163, %164 : vector<8x128xf32>
    %166 = arith.addf %3, %165 : vector<8x128xf32>
    %c0_57 = arith.constant 0 : index
    %c0_58 = arith.constant 0 : index
    %c0_59 = arith.constant 0 : index
    %167 = vector.load %arg10[%c0_57, %c0_58, %c0_59] : memref<1x1x128xf32, #tpu.memory_space<vmem>>, vector<1x1x128xf32>
    %168 = vector.shape_cast %167 : vector<1x1x128xf32> to vector<1x128xf32>
    %c0_60 = arith.constant 0 : index
    %c0_61 = arith.constant 0 : index
    %c0_62 = arith.constant 0 : index
    %169 = vector.load %arg11[%c0_60, %c0_61, %c0_62] : memref<1x1x128xf32, #tpu.memory_space<vmem>>, vector<1x1x128xf32>
    %170 = vector.shape_cast %169 : vector<1x1x128xf32> to vector<1x128xf32>
    %cst_63 = arith.constant dense<0.000000e+00> : vector<8xf32>
    %171 = vector.multi_reduction <add>, %166, %cst_63 [1] : vector<8x128xf32> to vector<8xf32>
    %172 = vector.shape_cast %171 : vector<8xf32> to vector<8x1xf32>
    %cst_64 = arith.constant 1.280000e+02 : f32
    %173 = vector.broadcast %cst_64 : f32 to vector<8x1xf32>
    %174 = arith.divf %172, %173 : vector<8x1xf32>
    %175 = vector.broadcast %174 : vector<8x1xf32> to vector<8x128xf32>
    %176 = arith.subf %166, %175 : vector<8x128xf32>
    %177 = arith.mulf %176, %176 : vector<8x128xf32>
    %cst_65 = arith.constant dense<0.000000e+00> : vector<8xf32>
    %178 = vector.multi_reduction <add>, %177, %cst_65 [1] : vector<8x128xf32> to vector<8xf32>
    %179 = vector.shape_cast %178 : vector<8xf32> to vector<8x1xf32>
    %cst_66 = arith.constant 1.270000e+02 : f32
    %180 = vector.broadcast %cst_66 : f32 to vector<8x1xf32>
    %181 = arith.divf %179, %180 : vector<8x1xf32>
    %182 = vector.broadcast %174 : vector<8x1xf32> to vector<8x128xf32>
    %183 = arith.subf %166, %182 : vector<8x128xf32>
    %184 = vector.broadcast %168 : vector<1x128xf32> to vector<8x128xf32>
    %185 = arith.mulf %184, %183 : vector<8x128xf32>
    %186 = math.sqrt %181 : vector<8x1xf32>
    %cst_67 = arith.constant 9.99999997E-7 : f32
    %187 = vector.broadcast %cst_67 : f32 to vector<8x1xf32>
    %188 = arith.addf %186, %187 : vector<8x1xf32>
    %189 = vector.broadcast %188 : vector<8x1xf32> to vector<8x128xf32>
    %190 = arith.divf %185, %189 : vector<8x128xf32>
    %191 = vector.broadcast %170 : vector<1x128xf32> to vector<8x128xf32>
    %192 = arith.addf %190, %191 : vector<8x128xf32>
    %193 = arith.truncf %192 : vector<8x128xf32> to vector<8x128xbf16>
    %c0_68 = arith.constant 0 : index
    %c0_69 = arith.constant 0 : index
    %c0_70 = arith.constant 0 : index
    %194 = vector.load %arg12[%c0_68, %c0_69, %c0_70] : memref<1x128x256xbf16, #tpu.memory_space<vmem>>, vector<1x128x256xbf16>
    %195 = vector.shape_cast %194 : vector<1x128x256xbf16> to vector<128x256xbf16>
    %cst_71 = arith.constant dense<0.000000e+00> : vector<8x256xf32>
    %196 = tpu.matmul %193, %195, %cst_71 {dimension_numbers = #tpu.dot_dimension_numbers<[1], [0], [0], [1], [0, 0, 1, 1], [], []>} : vector<8x128xbf16>, vector<128x256xbf16>, vector<8x256xf32> -> vector<8x256xf32>
    %c0_72 = arith.constant 0 : index
    %c0_73 = arith.constant 0 : index
    %c0_74 = arith.constant 0 : index
    %197 = vector.load %arg13[%c0_72, %c0_73, %c0_74] : memref<1x1x256xf32, #tpu.memory_space<vmem>>, vector<1x1x256xf32>
    %198 = vector.shape_cast %197 : vector<1x1x256xf32> to vector<1x256xf32>
    %199 = vector.broadcast %198 : vector<1x256xf32> to vector<8x256xf32>
    %200 = arith.addf %196, %199 : vector<8x256xf32>
    %cst_75 = arith.constant 0.000000e+00 : f32
    %201 = vector.broadcast %cst_75 : f32 to vector<8x256xf32>
    %202 = arith.maximumf %200, %201 : vector<8x256xf32>
    %203 = arith.truncf %202 : vector<8x256xf32> to vector<8x256xbf16>
    %c0_76 = arith.constant 0 : index
    %c0_77 = arith.constant 0 : index
    %c0_78 = arith.constant 0 : index
    %204 = vector.load %arg14[%c0_76, %c0_77, %c0_78] : memref<1x256x128xbf16, #tpu.memory_space<vmem>>, vector<1x256x128xbf16>
    %205 = vector.shape_cast %204 : vector<1x256x128xbf16> to vector<256x128xbf16>
    %cst_79 = arith.constant dense<0.000000e+00> : vector<8x128xf32>
    %206 = tpu.matmul %203, %205, %cst_79 {dimension_numbers = #tpu.dot_dimension_numbers<[1], [0], [0], [1], [0, 0, 1, 1], [], []>} : vector<8x256xbf16>, vector<256x128xbf16>, vector<8x128xf32> -> vector<8x128xf32>
    %207 = arith.addf %166, %206 : vector<8x128xf32>
    %c0_80 = arith.constant 0 : index
    %c0_81 = arith.constant 0 : index
    %c0_82 = arith.constant 0 : index
    %208 = vector.load %arg15[%c0_80, %c0_81, %c0_82] : memref<1x1x128xf32, #tpu.memory_space<vmem>>, vector<1x1x128xf32>
    %209 = vector.shape_cast %208 : vector<1x1x128xf32> to vector<1x128xf32>
    %210 = vector.broadcast %209 : vector<1x128xf32> to vector<8x128xf32>
    %211 = arith.addf %207, %210 : vector<8x128xf32>
    %c0_83 = arith.constant 0 : index
    %c0_84 = arith.constant 0 : index
    %212 = vector.load %arg19[%c0_83, %c0_84] : memref<8x128xf32, #tpu.memory_space<vmem>>, vector<8x128xf32>
    tpu.vector_store %arg19[%c0_83, %c0_84], %211 {strides = array<i32>} : memref<8x128xf32, #tpu.memory_space<vmem>>, vector<8x128xf32>,
    %c1_i32 = arith.constant 1 : i32
    %213 = arith.cmpi eq, %arg1, %c1_i32 : i32
    %214 = arith.extui %213 : i1 to i32
    %c0_i32_85 = arith.constant 0 : i32
    %215 = arith.cmpi ne, %214, %c0_i32_85 : i32
    scf.if %215 {
      %c0_86 = arith.constant 0 : index
      %c0_87 = arith.constant 0 : index
      %216 = vector.load %arg16[%c0_86, %c0_87] : memref<1x128xf32, #tpu.memory_space<vmem>>, vector<1x128xf32>
      %c0_88 = arith.constant 0 : index
      %c0_89 = arith.constant 0 : index
      %217 = vector.load %arg17[%c0_88, %c0_89] : memref<1x128xf32, #tpu.memory_space<vmem>>, vector<1x128xf32>
      %cst_90 = arith.constant dense<0.000000e+00> : vector<8xf32>
      %218 = vector.multi_reduction <add>, %211, %cst_90 [1] : vector<8x128xf32> to vector<8xf32>
      %219 = vector.shape_cast %218 : vector<8xf32> to vector<8x1xf32>
      %cst_91 = arith.constant 1.280000e+02 : f32
      %220 = vector.broadcast %cst_91 : f32 to vector<8x1xf32>
      %221 = arith.divf %219, %220 : vector<8x1xf32>
      %222 = vector.broadcast %221 : vector<8x1xf32> to vector<8x128xf32>
      %223 = arith.subf %211, %222 : vector<8x128xf32>
      %224 = arith.mulf %223, %223 : vector<8x128xf32>
      %cst_92 = arith.constant dense<0.000000e+00> : vector<8xf32>
      %225 = vector.multi_reduction <add>, %224, %cst_92 [1] : vector<8x128xf32> to vector<8xf32>
      %226 = vector.shape_cast %225 : vector<8xf32> to vector<8x1xf32>
      %cst_93 = arith.constant 1.270000e+02 : f32
      %227 = vector.broadcast %cst_93 : f32 to vector<8x1xf32>
      %228 = arith.divf %226, %227 : vector<8x1xf32>
      %229 = vector.broadcast %221 : vector<8x1xf32> to vector<8x128xf32>
      %230 = arith.subf %211, %229 : vector<8x128xf32>
      %231 = vector.broadcast %216 : vector<1x128xf32> to vector<8x128xf32>
      %232 = arith.mulf %231, %230 : vector<8x128xf32>
      %233 = math.sqrt %228 : vector<8x1xf32>
      %cst_94 = arith.constant 9.99999997E-7 : f32
      %234 = vector.broadcast %cst_94 : f32 to vector<8x1xf32>
      %235 = arith.addf %233, %234 : vector<8x1xf32>
      %236 = vector.broadcast %235 : vector<8x1xf32> to vector<8x128xf32>
      %237 = arith.divf %232, %236 : vector<8x128xf32>
      %238 = vector.broadcast %217 : vector<1x128xf32> to vector<8x128xf32>
      %239 = arith.addf %237, %238 : vector<8x128xf32>
      %c0_95 = arith.constant 0 : index
      %c0_96 = arith.constant 0 : index
      %c0_97 = arith.constant 0 : index
      %240 = vector.load %arg18[%c0_95, %c0_96, %c0_97] : memref<1x8x128xf32, #tpu.memory_space<vmem>>, vector<1x8x128xf32>
      %241 = vector.shape_cast %240 : vector<1x8x128xf32> to vector<8x128xf32>
      %242 = vector.shape_cast %239 : vector<8x128xf32> to vector<1x8x128xf32>
      tpu.vector_store %arg18[%c0_95, %c0_96, %c0_97], %242 {strides = array<i32>} : memref<1x8x128xf32, #tpu.memory_space<vmem>>, vector<1x8x128xf32>,
    } else {
    }
    return
  }
  func.func @transform_0(%arg0: i32, %arg1: i32) -> (i32, i32, i32) {
    %c0_i32 = arith.constant 0 : i32
    %c0_i32_0 = arith.constant 0 : i32
    %c0_i32_1 = arith.constant 0 : i32
    return %arg0, %c0_i32, %c0_i32_0 : i32, i32, i32
  }
  func.func @transform_1(%arg0: i32, %arg1: i32) -> (i32, i32, i32) {
    %c0_i32 = arith.constant 0 : i32
    %c0_i32_0 = arith.constant 0 : i32
    %c0_i32_1 = arith.constant 0 : i32
    return %arg0, %c0_i32, %c0_i32_0 : i32, i32, i32
  }
  func.func @transform_2(%arg0: i32, %arg1: i32) -> (i32, i32, i32) {
    %c0_i32 = arith.constant 0 : i32
    %c0_i32_0 = arith.constant 0 : i32
    %c0_i32_1 = arith.constant 0 : i32
    return %arg1, %c0_i32, %c0_i32_0 : i32, i32, i32
  }
  func.func @transform_3(%arg0: i32, %arg1: i32) -> (i32, i32, i32) {
    %c0_i32 = arith.constant 0 : i32
    %c0_i32_0 = arith.constant 0 : i32
    %c0_i32_1 = arith.constant 0 : i32
    return %arg1, %c0_i32, %c0_i32_0 : i32, i32, i32
  }
  func.func @transform_4(%arg0: i32, %arg1: i32) -> (i32, i32, i32) {
    %c0_i32 = arith.constant 0 : i32
    %c0_i32_0 = arith.constant 0 : i32
    %c0_i32_1 = arith.constant 0 : i32
    return %arg1, %c0_i32, %c0_i32_0 : i32, i32, i32
  }
  func.func @transform_5(%arg0: i32, %arg1: i32) -> (i32, i32, i32) {
    %c0_i32 = arith.constant 0 : i32
    %c0_i32_0 = arith.constant 0 : i32
    %c0_i32_1 = arith.constant 0 : i32
    return %arg1, %c0_i32, %c0_i32_0 : i32, i32, i32
  }
  func.func @transform_6(%arg0: i32, %arg1: i32) -> (i32, i32, i32) {
    %c0_i32 = arith.constant 0 : i32
    %c0_i32_0 = arith.constant 0 : i32
    %c0_i32_1 = arith.constant 0 : i32
    return %arg1, %c0_i32, %c0_i32_0 : i32, i32, i32
  }
  func.func @transform_7(%arg0: i32, %arg1: i32) -> (i32, i32, i32) {
    %c0_i32 = arith.constant 0 : i32
    %c0_i32_0 = arith.constant 0 : i32
    %c0_i32_1 = arith.constant 0 : i32
    return %arg1, %c0_i32, %c0_i32_0 : i32, i32, i32
  }
  func.func @transform_8(%arg0: i32, %arg1: i32) -> (i32, i32, i32) {
    %c0_i32 = arith.constant 0 : i32
    %c0_i32_0 = arith.constant 0 : i32
    %c0_i32_1 = arith.constant 0 : i32
    return %arg1, %c0_i32, %c0_i32_0 : i32, i32, i32
  }
  func.func @transform_9(%arg0: i32, %arg1: i32) -> (i32, i32, i32) {
    %c0_i32 = arith.constant 0 : i32
    %c0_i32_0 = arith.constant 0 : i32
    %c0_i32_1 = arith.constant 0 : i32
    return %arg1, %c0_i32, %c0_i32_0 : i32, i32, i32
  }
  func.func @transform_10(%arg0: i32, %arg1: i32) -> (i32, i32, i32) {
    %c0_i32 = arith.constant 0 : i32
    %c0_i32_0 = arith.constant 0 : i32
    %c0_i32_1 = arith.constant 0 : i32
    return %arg1, %c0_i32, %c0_i32_0 : i32, i32, i32
  }
  func.func @transform_11(%arg0: i32, %arg1: i32) -> (i32, i32, i32) {
    %c0_i32 = arith.constant 0 : i32
    %c0_i32_0 = arith.constant 0 : i32
    %c0_i32_1 = arith.constant 0 : i32
    return %arg1, %c0_i32, %c0_i32_0 : i32, i32, i32
  }
  func.func @transform_12(%arg0: i32, %arg1: i32) -> (i32, i32, i32) {
    %c0_i32 = arith.constant 0 : i32
    %c0_i32_0 = arith.constant 0 : i32
    %c0_i32_1 = arith.constant 0 : i32
    return %arg1, %c0_i32, %c0_i32_0 : i32, i32, i32
  }
  func.func @transform_13(%arg0: i32, %arg1: i32) -> (i32, i32, i32) {
    %c0_i32 = arith.constant 0 : i32
    %c0_i32_0 = arith.constant 0 : i32
    %c0_i32_1 = arith.constant 0 : i32
    return %arg1, %c0_i32, %c0_i32_0 : i32, i32, i32
  }
  func.func @transform_14(%arg0: i32, %arg1: i32) -> (i32, i32) {
    %c0_i32 = arith.constant 0 : i32
    %c0_i32_0 = arith.constant 0 : i32
    %c0_i32_1 = arith.constant 0 : i32
    return %c0_i32, %c0_i32_0 : i32, i32
  }
  func.func @transform_15(%arg0: i32, %arg1: i32) -> (i32, i32) {
    %c0_i32 = arith.constant 0 : i32
    %c0_i32_0 = arith.constant 0 : i32
    %c0_i32_1 = arith.constant 0 : i32
    return %c0_i32, %c0_i32_0 : i32, i32
  }
  func.func @transform_16(%arg0: i32, %arg1: i32) -> (i32, i32, i32) {
    %c0_i32 = arith.constant 0 : i32
    %c0_i32_0 = arith.constant 0 : i32
    %c0_i32_1 = arith.constant 0 : i32
    return %arg0, %c0_i32, %c0_i32_0 : i32, i32, i32
  }
}

</mosaic_0001>

<llo_original>
// kernel: tpu_custom_call.1
$region0: #{tpu_custom_call.1}
  #allocation0 [shape = 'u32[]', space=smem, size = 0x4, offset = 0x4, fixed_abs, tag = 'smem constant byte address 0x4 - core index']
  #allocation1 [shape = 'u32[144,128]{1,0:T(1,128)}', space=vmem, size = 0x12000, scoped, tag = 'internal scratch']
  #allocation2 [shape = 'f32[8,128]{1,0:T(8,128)}', space=vmem, size = 0x1000, scoped, tag = 'scratch operand']
  %s0 = inlined_call_operand.hbm [shape: f32[2,8,128], index: 0, kind: input, shape index: {}]
  %s1 = inlined_call_operand.hbm [shape: f32[2,1,8], index: 1, kind: input, shape index: {}]
  %s2 = inlined_call_operand.hbm [shape: f32[2,1,128], index: 2, kind: input, shape index: {}]
  %s3 = inlined_call_operand.hbm [shape: f32[2,1,128], index: 3, kind: input, shape index: {}]
  %s4 = inlined_call_operand.hbm [shape: bf16[2,128,384], index: 4, kind: input, shape index: {}]
  %s5 = inlined_call_operand.vmem [shape: f32[2,1,384], index: 5, kind: input, shape index: {}]
  %s6 = inlined_call_operand.hbm [shape: bf16[2,128,128], index: 6, kind: input, shape index: {}]
  %s7 = inlined_call_operand.vmem [shape: f32[2,1,128], index: 7, kind: input, shape index: {}]
  %s8 = inlined_call_operand.vmem [shape: f32[2,1,128], index: 8, kind: input, shape index: {}]
  %s9 = inlined_call_operand.vmem [shape: f32[2,1,128], index: 9, kind: input, shape index: {}]
  %s10 = inlined_call_operand.hbm [shape: bf16[2,128,256], index: 10, kind: input, shape index: {}]
  %s11 = inlined_call_operand.vmem [shape: f32[2,1,256], index: 11, kind: input, shape index: {}]
  %s12 = inlined_call_operand.hbm [shape: bf16[2,256,128], index: 12, kind: input, shape index: {}]
  %s13 = inlined_call_operand.vmem [shape: f32[2,1,128], index: 13, kind: input, shape index: {}]
  %s14 = inlined_call_operand.vmem [shape: f32[1,128], index: 14, kind: input, shape index: {}]
  %s15 = inlined_call_operand.vmem [shape: f32[1,128], index: 15, kind: input, shape index: {}]
  %s16 = inlined_call_operand.hbm [shape: f32[2,8,128], index: 16, kind: output, shape index: {}]
  %s17 = sld [smem:[#allocation0]]
  $region137: #{tpu_custom_call.1} parent=0
    _
  %s19 = ssub.s32 1, %s17
  %s20 = scalar_select 0, %s19, %s17
  $region1: #{tpu_custom_call.1} parent=0
    #allocation3 [shape = 'u8[8192]{0}', space=vmem, size = 0x2000, scoped, tag = 'input window, operand 0']
    #allocation4 [shape = 's32[2]{0}', space=sflag, size = 0x8, scoped, tag = 'scoped memory for tpu_custom_call.1']
    #allocation5 [shape = 's32[2]{0}', space=sflag, size = 0x8, scoped, tag = 'scoped memory for tpu_custom_call.1']
    #allocation6 [shape = 'u8[1024]{0}', space=vmem, size = 0x400, scoped, tag = 'input window, operand 1']
    #allocation7 [shape = 's32[2]{0}', space=sflag, size = 0x8, scoped, tag = 'scoped memory for tpu_custom_call.1']
    #allocation8 [shape = 'u8[1024]{0}', space=vmem, size = 0x400, scoped, tag = 'input window, operand 2']
    #allocation9 [shape = 'u8[1024]{0}', space=vmem, size = 0x400, scoped, tag = 'input window, operand 3']
    #allocation10 [shape = 's32[2]{0}', space=sflag, size = 0x8, scoped, tag = 'scoped memory for tpu_custom_call.1']
    #allocation11 [shape = 'u8[196608]{0}', space=vmem, size = 0x30000, scoped, tag = 'input window, operand 4']
    #allocation12 [shape = 'u8[65536]{0}', space=vmem, size = 0x10000, scoped, tag = 'input window, operand 6']
    #allocation13 [shape = 's32[2]{0}', space=sflag, size = 0x8, scoped, tag = 'scoped memory for tpu_custom_call.1']
    #allocation14 [shape = 'u8[131072]{0}', space=vmem, size = 0x20000, scoped, tag = 'input window, operand 10']
    #allocation15 [shape = 'u8[131072]{0}', space=vmem, size = 0x20000, scoped, tag = 'input window, operand 12']
    #allocation16 [shape = 's32[2]{0}', space=sflag, size = 0x8, scoped, tag = 'scoped memory for tpu_custom_call.1']
    #allocation17 [shape = 'u8[8192]{0}', space=vmem, size = 0x2000, scoped, tag = 'output window, operand 0']
    %21 = vsyncpa [#allocation4], 0
    %s22 = scalar_lea.sflag [#allocation4], 1
    %23 = vsyncpa %s22, 0
    %24 = vsyncpa [#allocation7], 0
    %s25 = scalar_lea.sflag [#allocation7], 1
    %26 = vsyncpa %s25, 0
    %27 = vsyncpa [#allocation10], 0
    %s28 = scalar_lea.sflag [#allocation10], 1
    %29 = vsyncpa %s28, 0
    %30 = vsyncpa [#allocation13], 0
    %s31 = scalar_lea.sflag [#allocation13], 1
    %32 = vsyncpa %s31, 0
    %33 = vsyncpa [#allocation16], 0
    %s34 = scalar_lea.sflag [#allocation16], 1
    %35 = vsyncpa %s34, 0
    %36 = vsyncpa [#allocation5], 0
    %s37 = scalar_lea.sflag [#allocation5], 1
    %38 = vsyncpa %s37, 0
    loop: start=0, step=1, limit=6
    $region2: #{tpu_custom_call.1} parent=1 // loop_pre_header
      _
    $region3: #{tpu_custom_call.1} parent=1 // loop_header
      %s40 = sphi 0, %s44
      %p41 = scmp.ge.s32.totalorder %s40, 6
      %s47 = sphi 0, %s59
      %s48 = sphi 0, %s55
      %s49 = sphi 0, %s47
      %s50 = sphi 0, %s48
      %s51 = sphi 0, %s49
      %s52 = sphi 0, %s50
      %s62 = sphi 0, %s64
      %s65 = sphi 0, %s62
      %s66 = sphi 0, %s65
      %s82 = sphi 0, %s66
      %s88 = sphi 0, %s90
      %s91 = sphi 0, %s88
      %s92 = sphi 0, %s91
      %s108 = sphi 0, %s92
      %s114 = sphi 0, %s116
      %s117 = sphi 0, %s114
      %s118 = sphi 0, %s117
      %s134 = sphi 0, %s118
      %s140 = sphi 0, %s142
      %s143 = sphi 0, %s140
      %s144 = sphi 0, %s143
      %s160 = sphi 0, %s144
      %s166 = sphi 0, %s168
      %s169 = sphi 0, %s166
      %s170 = sphi 0, %s169
      %s186 = sphi 0, %s170
      %s192 = sphi 0, %s194
      %s195 = sphi 0, %s192
      %s196 = sphi 0, %s195
      %s212 = sphi 0, %s196
      %s218 = sphi 0, %s220
      %s221 = sphi 0, %s218
      %s222 = sphi 0, %s221
      %s238 = sphi 0, %s222
      %s244 = sphi 0, %s246
      %s247 = sphi 0, %s244
      %s248 = sphi 0, %s247
      %s264 = sphi 0, %s248
      %s270 = sphi 0, %s272
      %s273 = sphi 0, %s270
      %s274 = sphi 0, %s273
      %s290 = sphi 0, %s274
      %s296 = sphi 0, %s298
      %s299 = sphi 0, %s296
      %s300 = sphi 0, %s299
      %s316 = sphi 0, %s300
      %s322 = sphi 0, %s324
      %s325 = sphi 0, %s322
      %s326 = sphi 0, %s325
      %s342 = sphi 0, %s326
      %s348 = sphi 0, %s350
      %s351 = sphi 0, %s348
      %s352 = sphi 0, %s351
      %s368 = sphi 0, %s352
      %s374 = sphi 0, %s376
      %s377 = sphi 0, %s374
      %s378 = sphi 0, %s377
      %s394 = sphi 0, %s378
      %s400 = sphi 0, %s402
      %s403 = sphi 0, %s400
      %s404 = sphi 0, %s403
      %s420 = sphi 0, %s404
      %s424 = sphi 0, %s424
      %s426 = sphi 0, %s424
      %s427 = sphi 0, %s426
      %s441 = sphi 0, %s427
      %s445 = sphi 0, %s445
      %s447 = sphi 0, %s445
      %s448 = sphi 0, %s447
      %s462 = sphi 0, %s448
      %s468 = sphi 0, %s470
      %s471 = sphi 0, %s468
      %s472 = sphi 0, %s471
      %s488 = sphi 0, %s472
    $region4: #{tpu_custom_call.1} parent=1 // loop_header_branch
      %43 = sbr.rel (%p41) target = $region8
    $region5: #{tpu_custom_call.1} parent=1 // loop_body
      %s45 = ssub.s32 %s40, 1
      %s46 = ssub.s32 %s40, 2
      %s53 = sadd.s32 1, %s48
      %p54 = scmp.ge.s32.totalorder %s53, 2
      %s55 = scalar_select %p54, 0, %s53
      %s56 = sadd.s32 1, %s47
      %s57 = scalar_select %p54, %s56, %s47
      %p58 = scmp.ge.s32.totalorder %s57, 2
      %s59 = scalar_select %p58, 0, %s57
      %s60 = ssub.s32 %s47, %s59
      %p61 = scmp.eq.s32.totalorder %s60, 0
      %s63 = sadd.s32 %s62, 1
      %s64 = scalar_select %p61, %s62, %s63
      %p67 = pneg %p61
      %p68 = scmp.eq.s32.totalorder %s40, 3
      %p69 = por %p67, %p68
      %p70 = scmp.ne.s32.totalorder %s62, %s65
      %p71 = scmp.eq.s32.totalorder %s40, 0
      %p72 = por %p70, %p71
      %p73 = scmp.ne.s32.totalorder %s62, %s65
      %p74 = scmp.eq.s32.totalorder %s45, 3
      %p75 = por %p73, %p74
      %p76 = scmp.ne.s32.totalorder %s65, %s66
      %p77 = scmp.eq.s32.totalorder %s45, 0
      %p78 = por %p76, %p77
      %p79 = scmp.ne.s32.totalorder %s65, %s66
      %p80 = scmp.eq.s32.totalorder %s46, 3
      %p81 = por %p79, %p80
      %p83 = scmp.ne.s32.totalorder %s66, %s82
      %p84 = scmp.eq.s32.totalorder %s46, 0
      %p85 = por %p83, %p84
      %s86 = ssub.s32 %s47, %s59
      %p87 = scmp.eq.s32.totalorder %s86, 0
      %s89 = sadd.s32 %s88, 1
      %s90 = scalar_select %p87, %s88, %s89
      %p93 = pneg %p87
      %p94 = scmp.eq.s32.totalorder %s40, 3
      %p95 = por %p93, %p94
      %p96 = scmp.ne.s32.totalorder %s88, %s91
      %p97 = scmp.eq.s32.totalorder %s40, 0
      %p98 = por %p96, %p97
      %p99 = scmp.ne.s32.totalorder %s88, %s91
      %p100 = scmp.eq.s32.totalorder %s45, 3
      %p101 = por %p99, %p100
      %p102 = scmp.ne.s32.totalorder %s91, %s92
      %p103 = scmp.eq.s32.totalorder %s45, 0
      %p104 = por %p102, %p103
      %p105 = scmp.ne.s32.totalorder %s91, %s92
      %p106 = scmp.eq.s32.totalorder %s46, 3
      %p107 = por %p105, %p106
      %p109 = scmp.ne.s32.totalorder %s92, %s108
      %p110 = scmp.eq.s32.totalorder %s46, 0
      %p111 = por %p109, %p110
      %s112 = ssub.s32 %s48, %s55
      %p113 = scmp.eq.s32.totalorder %s112, 0
      %s115 = sadd.s32 %s114, 1
      %s116 = scalar_select %p113, %s114, %s115
      %p119 = pneg %p113
      %p120 = scmp.eq.s32.totalorder %s40, 3
      %p121 = por %p119, %p120
      %p122 = scmp.ne.s32.totalorder %s114, %s117
      %p123 = scmp.eq.s32.totalorder %s40, 0
      %p124 = por %p122, %p123
      %p125 = scmp.ne.s32.totalorder %s114, %s117
      %p126 = scmp.eq.s32.totalorder %s45, 3
      %p127 = por %p125, %p126
      %p128 = scmp.ne.s32.totalorder %s117, %s118
      %p129 = scmp.eq.s32.totalorder %s45, 0
      %p130 = por %p128, %p129
      %p131 = scmp.ne.s32.totalorder %s117, %s118
      %p132 = scmp.eq.s32.totalorder %s46, 3
      %p133 = por %p131, %p132
      %p135 = scmp.ne.s32.totalorder %s118, %s134
      %p136 = scmp.eq.s32.totalorder %s46, 0
      %p137 = por %p135, %p136
      %s138 = ssub.s32 %s48, %s55
      %p139 = scmp.eq.s32.totalorder %s138, 0
      %s141 = sadd.s32 %s140, 1
      %s142 = scalar_select %p139, %s140, %s141
      %p145 = pneg %p139
      %p146 = scmp.eq.s32.totalorder %s40, 3
      %p147 = por %p145, %p146
      %p148 = scmp.ne.s32.totalorder %s140, %s143
      %p149 = scmp.eq.s32.totalorder %s40, 0
      %p150 = por %p148, %p149
      %p151 = scmp.ne.s32.totalorder %s140, %s143
      %p152 = scmp.eq.s32.totalorder %s45, 3
      %p153 = por %p151, %p152
      %p154 = scmp.ne.s32.totalorder %s143, %s144
      %p155 = scmp.eq.s32.totalorder %s45, 0
      %p156 = por %p154, %p155
      %p157 = scmp.ne.s32.totalorder %s143, %s144
      %p158 = scmp.eq.s32.totalorder %s46, 3
      %p159 = por %p157, %p158
      %p161 = scmp.ne.s32.totalorder %s144, %s160
      %p162 = scmp.eq.s32.totalorder %s46, 0
      %p163 = por %p161, %p162
      %s164 = ssub.s32 %s48, %s55
      %p165 = scmp.eq.s32.totalorder %s164, 0
      %s167 = sadd.s32 %s166, 1
      %s168 = scalar_select %p165, %s166, %s167
      %p171 = pneg %p165
      %p172 = scmp.eq.s32.totalorder %s40, 3
      %p173 = por %p171, %p172
      %p174 = scmp.ne.s32.totalorder %s166, %s169
      %p175 = scmp.eq.s32.totalorder %s40, 0
      %p176 = por %p174, %p175
      %p177 = scmp.ne.s32.totalorder %s166, %s169
      %p178 = scmp.eq.s32.totalorder %s45, 3
      %p179 = por %p177, %p178
      %p180 = scmp.ne.s32.totalorder %s169, %s170
      %p181 = scmp.eq.s32.totalorder %s45, 0
      %p182 = por %p180, %p181
      %p183 = scmp.ne.s32.totalorder %s169, %s170
      %p184 = scmp.eq.s32.totalorder %s46, 3
      %p185 = por %p183, %p184
      %p187 = scmp.ne.s32.totalorder %s170, %s186
      %p188 = scmp.eq.s32.totalorder %s46, 0
      %p189 = por %p187, %p188
      %s190 = ssub.s32 %s48, %s55
      %p191 = scmp.eq.s32.totalorder %s190, 0
      %s193 = sadd.s32 %s192, 1
      %s194 = scalar_select %p191, %s192, %s193
      %p197 = pneg %p191
      %p198 = scmp.eq.s32.totalorder %s40, 3
      %p199 = por %p197, %p198
      %p200 = scmp.ne.s32.totalorder %s192, %s195
      %p201 = scmp.eq.s32.totalorder %s40, 0
      %p202 = por %p200, %p201
      %p203 = scmp.ne.s32.totalorder %s192, %s195
      %p204 = scmp.eq.s32.totalorder %s45, 3
      %p205 = por %p203, %p204
      %p206 = scmp.ne.s32.totalorder %s195, %s196
      %p207 = scmp.eq.s32.totalorder %s45, 0
      %p208 = por %p206, %p207
      %p209 = scmp.ne.s32.totalorder %s195, %s196
      %p210 = scmp.eq.s32.totalorder %s46, 3
      %p211 = por %p209, %p210
      %p213 = scmp.ne.s32.totalorder %s196, %s212
      %p214 = scmp.eq.s32.totalorder %s46, 0
      %p215 = por %p213, %p214
      %s216 = ssub.s32 %s48, %s55
      %p217 = scmp.eq.s32.totalorder %s216, 0
      %s219 = sadd.s32 %s218, 1
      %s220 = scalar_select %p217, %s218, %s219
      %p223 = pneg %p217
      %p224 = scmp.eq.s32.totalorder %s40, 3
      %p225 = por %p223, %p224
      %p226 = scmp.ne.s32.totalorder %s218, %s221
      %p227 = scmp.eq.s32.totalorder %s40, 0
      %p228 = por %p226, %p227
      %p229 = scmp.ne.s32.totalorder %s218, %s221
      %p230 = scmp.eq.s32.totalorder %s45, 3
      %p231 = por %p229, %p230
      %p232 = scmp.ne.s32.totalorder %s221, %s222
      %p233 = scmp.eq.s32.totalorder %s45, 0
      %p234 = por %p232, %p233
      %p235 = scmp.ne.s32.totalorder %s221, %s222
      %p236 = scmp.eq.s32.totalorder %s46, 3
      %p237 = por %p235, %p236
      %p239 = scmp.ne.s32.totalorder %s222, %s238
      %p240 = scmp.eq.s32.totalorder %s46, 0
      %p241 = por %p239, %p240
      %s242 = ssub.s32 %s48, %s55
      %p243 = scmp.eq.s32.totalorder %s242, 0
      %s245 = sadd.s32 %s244, 1
      %s246 = scalar_select %p243, %s244, %s245
      %p249 = pneg %p243
      %p250 = scmp.eq.s32.totalorder %s40, 3
      %p251 = por %p249, %p250
      %p252 = scmp.ne.s32.totalorder %s244, %s247
      %p253 = scmp.eq.s32.totalorder %s40, 0
      %p254 = por %p252, %p253
      %p255 = scmp.ne.s32.totalorder %s244, %s247
      %p256 = scmp.eq.s32.totalorder %s45, 3
      %p257 = por %p255, %p256
      %p258 = scmp.ne.s32.totalorder %s247, %s248
      %p259 = scmp.eq.s32.totalorder %s45, 0
      %p260 = por %p258, %p259
      %p261 = scmp.ne.s32.totalorder %s247, %s248
      %p262 = scmp.eq.s32.totalorder %s46, 3
      %p263 = por %p261, %p262
      %p265 = scmp.ne.s32.totalorder %s248, %s264
      %p266 = scmp.eq.s32.totalorder %s46, 0
      %p267 = por %p265, %p266
      %s268 = ssub.s32 %s48, %s55
      %p269 = scmp.eq.s32.totalorder %s268, 0
      %s271 = sadd.s32 %s270, 1
      %s272 = scalar_select %p269, %s270, %s271
      %p275 = pneg %p269
      %p276 = scmp.eq.s32.totalorder %s40, 3
      %p277 = por %p275, %p276
      %p278 = scmp.ne.s32.totalorder %s270, %s273
      %p279 = scmp.eq.s32.totalorder %s40, 0
      %p280 = por %p278, %p279
      %p281 = scmp.ne.s32.totalorder %s270, %s273
      %p282 = scmp.eq.s32.totalorder %s45, 3
      %p283 = por %p281, %p282
      %p284 = scmp.ne.s32.totalorder %s273, %s274
      %p285 = scmp.eq.s32.totalorder %s45, 0
      %p286 = por %p284, %p285
      %p287 = scmp.ne.s32.totalorder %s273, %s274
      %p288 = scmp.eq.s32.totalorder %s46, 3
      %p289 = por %p287, %p288
      %p291 = scmp.ne.s32.totalorder %s274, %s290
      %p292 = scmp.eq.s32.totalorder %s46, 0
      %p293 = por %p291, %p292
      %s294 = ssub.s32 %s48, %s55
      %p295 = scmp.eq.s32.totalorder %s294, 0
      %s297 = sadd.s32 %s296, 1
      %s298 = scalar_select %p295, %s296, %s297
      %p301 = pneg %p295
      %p302 = scmp.eq.s32.totalorder %s40, 3
      %p303 = por %p301, %p302
      %p304 = scmp.ne.s32.totalorder %s296, %s299
      %p305 = scmp.eq.s32.totalorder %s40, 0
      %p306 = por %p304, %p305
      %p307 = scmp.ne.s32.totalorder %s296, %s299
      %p308 = scmp.eq.s32.totalorder %s45, 3
      %p309 = por %p307, %p308
      %p310 = scmp.ne.s32.totalorder %s299, %s300
      %p311 = scmp.eq.s32.totalorder %s45, 0
      %p312 = por %p310, %p311
      %p313 = scmp.ne.s32.totalorder %s299, %s300
      %p314 = scmp.eq.s32.totalorder %s46, 3
      %p315 = por %p313, %p314
      %p317 = scmp.ne.s32.totalorder %s300, %s316
      %p318 = scmp.eq.s32.totalorder %s46, 0
      %p319 = por %p317, %p318
      %s320 = ssub.s32 %s48, %s55
      %p321 = scmp.eq.s32.totalorder %s320, 0
      %s323 = sadd.s32 %s322, 1
      %s324 = scalar_select %p321, %s322, %s323
      %p327 = pneg %p321
      %p328 = scmp.eq.s32.totalorder %s40, 3
      %p329 = por %p327, %p328
      %p330 = scmp.ne.s32.totalorder %s322, %s325
      %p331 = scmp.eq.s32.totalorder %s40, 0
      %p332 = por %p330, %p331
      %p333 = scmp.ne.s32.totalorder %s322, %s325
      %p334 = scmp.eq.s32.totalorder %s45, 3
      %p335 = por %p333, %p334
      %p336 = scmp.ne.s32.totalorder %s325, %s326
      %p337 = scmp.eq.s32.totalorder %s45, 0
      %p338 = por %p336, %p337
      %p339 = scmp.ne.s32.totalorder %s325, %s326
      %p340 = scmp.eq.s32.totalorder %s46, 3
      %p341 = por %p339, %p340
      %p343 = scmp.ne.s32.totalorder %s326, %s342
      %p344 = scmp.eq.s32.totalorder %s46, 0
      %p345 = por %p343, %p344
      %s346 = ssub.s32 %s48, %s55
      %p347 = scmp.eq.s32.totalorder %s346, 0
      %s349 = sadd.s32 %s348, 1
      %s350 = scalar_select %p347, %s348, %s349
      %p353 = pneg %p347
      %p354 = scmp.eq.s32.totalorder %s40, 3
      %p355 = por %p353, %p354
      %p356 = scmp.ne.s32.totalorder %s348, %s351
      %p357 = scmp.eq.s32.totalorder %s40, 0
      %p358 = por %p356, %p357
      %p359 = scmp.ne.s32.totalorder %s348, %s351
      %p360 = scmp.eq.s32.totalorder %s45, 3
      %p361 = por %p359, %p360
      %p362 = scmp.ne.s32.totalorder %s351, %s352
      %p363 = scmp.eq.s32.totalorder %s45, 0
      %p364 = por %p362, %p363
      %p365 = scmp.ne.s32.totalorder %s351, %s352
      %p366 = scmp.eq.s32.totalorder %s46, 3
      %p367 = por %p365, %p366
      %p369 = scmp.ne.s32.totalorder %s352, %s368
      %p370 = scmp.eq.s32.totalorder %s46, 0
      %p371 = por %p369, %p370
      %s372 = ssub.s32 %s48, %s55
      %p373 = scmp.eq.s32.totalorder %s372, 0
      %s375 = sadd.s32 %s374, 1
      %s376 = scalar_select %p373, %s374, %s375
      %p379 = pneg %p373
      %p380 = scmp.eq.s32.totalorder %s40, 3
      %p381 = por %p379, %p380
      %p382 = scmp.ne.s32.totalorder %s374, %s377
      %p383 = scmp.eq.s32.totalorder %s40, 0
      %p384 = por %p382, %p383
      %p385 = scmp.ne.s32.totalorder %s374, %s377
      %p386 = scmp.eq.s32.totalorder %s45, 3
      %p387 = por %p385, %p386
      %p388 = scmp.ne.s32.totalorder %s377, %s378
      %p389 = scmp.eq.s32.totalorder %s45, 0
      %p390 = por %p388, %p389
      %p391 = scmp.ne.s32.totalorder %s377, %s378
      %p392 = scmp.eq.s32.totalorder %s46, 3
      %p393 = por %p391, %p392
      %p395 = scmp.ne.s32.totalorder %s378, %s394
      %p396 = scmp.eq.s32.totalorder %s46, 0
      %p397 = por %p395, %p396
      %s398 = ssub.s32 %s48, %s55
      %p399 = scmp.eq.s32.totalorder %s398, 0
      %s401 = sadd.s32 %s400, 1
      %s402 = scalar_select %p399, %s400, %s401
      %p405 = pneg %p399
      %p406 = scmp.eq.s32.totalorder %s40, 3
      %p407 = por %p405, %p406
      %p408 = scmp.ne.s32.totalorder %s400, %s403
      %p409 = scmp.eq.s32.totalorder %s40, 0
      %p410 = por %p408, %p409
      %p411 = scmp.ne.s32.totalorder %s400, %s403
      %p412 = scmp.eq.s32.totalorder %s45, 3
      %p413 = por %p411, %p412
      %p414 = scmp.ne.s32.totalorder %s403, %s404
      %p415 = scmp.eq.s32.totalorder %s45, 0
      %p416 = por %p414, %p415
      %p417 = scmp.ne.s32.totalorder %s403, %s404
      %p418 = scmp.eq.s32.totalorder %s46, 3
      %p419 = por %p417, %p418
      %p421 = scmp.ne.s32.totalorder %s404, %s420
      %p422 = scmp.eq.s32.totalorder %s46, 0
      %p423 = por %p421, %p422
      %s425 = sadd.s32 %s424, 1
      %p428 = scmp.eq.s32.totalorder %s40, 3
      %p429 = scmp.ne.s32.totalorder %s424, %s426
      %p430 = scmp.eq.s32.totalorder %s40, 0
      %p431 = por %p429, %p430
      %p432 = scmp.ne.s32.totalorder %s424, %s426
      %p433 = scmp.eq.s32.totalorder %s45, 3
      %p434 = por %p432, %p433
      %p435 = scmp.ne.s32.totalorder %s426, %s427
      %p436 = scmp.eq.s32.totalorder %s45, 0
      %p437 = por %p435, %p436
      %p438 = scmp.ne.s32.totalorder %s426, %s427
      %p439 = scmp.eq.s32.totalorder %s46, 3
      %p440 = por %p438, %p439
      %p442 = scmp.ne.s32.totalorder %s427, %s441
      %p443 = scmp.eq.s32.totalorder %s46, 0
      %p444 = por %p442, %p443
      %s446 = sadd.s32 %s445, 1
      %p449 = scmp.eq.s32.totalorder %s40, 3
      %p450 = scmp.ne.s32.totalorder %s445, %s447
      %p451 = scmp.eq.s32.totalorder %s40, 0
      %p452 = por %p450, %p451
      %p453 = scmp.ne.s32.totalorder %s445, %s447
      %p454 = scmp.eq.s32.totalorder %s45, 3
      %p455 = por %p453, %p454
      %p456 = scmp.ne.s32.totalorder %s447, %s448
      %p457 = scmp.eq.s32.totalorder %s45, 0
      %p458 = por %p456, %p457
      %p459 = scmp.ne.s32.totalorder %s447, %s448
      %p460 = scmp.eq.s32.totalorder %s46, 3
      %p461 = por %p459, %p460
      %p463 = scmp.ne.s32.totalorder %s448, %s462
      %p464 = scmp.eq.s32.totalorder %s46, 0
      %p465 = por %p463, %p464
      %s466 = ssub.s32 %s47, %s59
      %p467 = scmp.eq.s32.totalorder %s466, 0
      %s469 = sadd.s32 %s468, 1
      %s470 = scalar_select %p467, %s468, %s469
      %p473 = pneg %p467
      %p474 = scmp.eq.s32.totalorder %s40, 3
      %p475 = por %p473, %p474
      %p476 = scmp.ne.s32.totalorder %s468, %s471
      %p477 = scmp.eq.s32.totalorder %s40, 0
      %p478 = por %p476, %p477
      %p479 = scmp.ne.s32.totalorder %s468, %s471
      %p480 = scmp.eq.s32.totalorder %s45, 3
      %p481 = por %p479, %p480
      %p482 = scmp.ne.s32.totalorder %s471, %s472
      %p483 = scmp.eq.s32.totalorder %s45, 0
      %p484 = por %p482, %p483
      %p485 = scmp.ne.s32.totalorder %s471, %s472
      %p486 = scmp.eq.s32.totalorder %s46, 3
      %p487 = por %p485, %p486
      %p489 = scmp.ne.s32.totalorder %s472, %s488
      %p490 = scmp.eq.s32.totalorder %s46, 0
      %p491 = por %p489, %p490
      %p492 = scmp.le.s32.totalorder 1, %s40
      %p493 = scmp.lt.s32.totalorder %s40, 5
      %p494 = pnand %p492, %p493
      %p495 = pneg %p494
      // Predicated region
      $region9: #{tpu_custom_call.1} parent=5 // pred_check
        _
      $region10: #{tpu_custom_call.1} parent=5 // pred_check_branch
        %497 = sbr.rel (%p494) target = $region12
      $region11: #{tpu_custom_call.1} parent=5 // pred_region
        %s498 = ssub.s32 %s40, 1
        // Predicated region
        $region13: #{tpu_custom_call.1} parent=11 // pred_check
          %p499 = pneg %p437
        $region14: #{tpu_custom_call.1} parent=11 // pred_check_branch
          %501 = sbr.rel (%p499) target = $region16
        $region15: #{tpu_custom_call.1} parent=11 // pred_region
          _
        $region16: #{tpu_custom_call.1} parent=11 // pred_fallthru
          _
        // Predicated region
        $region17: #{tpu_custom_call.1} parent=11 // pred_check
          %p502 = pneg %p458
        $region18: #{tpu_custom_call.1} parent=11 // pred_check_branch
          %504 = sbr.rel (%p502) target = $region20
        $region19: #{tpu_custom_call.1} parent=11 // pred_region
          _
        $region20: #{tpu_custom_call.1} parent=11 // pred_fallthru
          _
      $region12: #{tpu_custom_call.1} parent=5 // pred_fallthru
        _
      %p505 = scmp.lt.s32.totalorder %s40, 4
      // Predicated region
      $region21: #{tpu_custom_call.1} parent=5 // pred_check
        %p506 = pneg %p505
      $region22: #{tpu_custom_call.1} parent=5 // pred_check_branch
        %508 = sbr.rel (%p506) target = $region24
      $region23: #{tpu_custom_call.1} parent=5 // pred_region
        // Predicated region
        $region25: #{tpu_custom_call.1} parent=23 // pred_check
          %p509 = pneg %p72
        $region26: #{tpu_custom_call.1} parent=23 // pred_check_branch
          %511 = sbr.rel (%p509) target = $region28
        $region27: #{tpu_custom_call.1} parent=23 // pred_region
          %s512 = sand.u32 %s62, 1
          %s513 = scalar_lea.sflag [#allocation4], %s512
          %s514 = sand.u32 %s62, 1
          %s515 = smul.addr %s514, 8
          %s516 = scalar_lea.vmem [#allocation3], %s515
          %s518 = ssub.s32 128, 128
          %519 = vsyncadd %s513, %s518
          %s520 = smul.addr %s47, 128
          %s521 = scalar_lea.hbm %s0, %s520
          %s523 = sshll.u32 %s516, 4
          %s524 = int_to_ptr.vmem [resolvable:$true] %s523
          %526 = dma.hbm_to_vmem [thread:$0]  %s521, 128, %s524, %s513
        $region28: #{tpu_custom_call.1} parent=23 // pred_fallthru
          _
        // Predicated region
        $region29: #{tpu_custom_call.1} parent=23 // pred_check
          %p527 = pneg %p98
        $region30: #{tpu_custom_call.1} parent=23 // pred_check_branch
          %529 = sbr.rel (%p527) target = $region32
        $region31: #{tpu_custom_call.1} parent=23 // pred_region
          %s530 = sand.u32 %s40, 1
          %s531 = scalar_lea.sflag [#allocation7], %s530
          %s532 = sand.u32 %s88, 1
          %s533 = scalar_lea.vmem [#allocation6], %s532
          %s535 = ssub.s32 16, 16
          %536 = vsyncadd %s531, %s535
          %s537 = smul.addr %s47, 16
          %s538 = scalar_lea.hbm %s1, %s537
          %s540 = sshll.u32 %s533, 4
          %s541 = int_to_ptr.vmem [resolvable:$true] %s540
          %543 = dma.hbm_to_vmem [thread:$0]  %s538, 16, %s541, %s531
        $region32: #{tpu_custom_call.1} parent=23 // pred_fallthru
          _
        // Predicated region
        $region33: #{tpu_custom_call.1} parent=23 // pred_check
          %p544 = pneg %p124
        $region34: #{tpu_custom_call.1} parent=23 // pred_check_branch
          %546 = sbr.rel (%p544) target = $region36
        $region35: #{tpu_custom_call.1} parent=23 // pred_region
          %s547 = sand.u32 %s40, 1
          %s548 = scalar_lea.sflag [#allocation7], %s547
          %s549 = sand.u32 %s114, 1
          %s550 = scalar_lea.vmem [#allocation8], %s549
          %s552 = ssub.s32 16, 16
          %553 = vsyncadd %s548, %s552
          %s554 = smul.addr %s48, 16
          %s555 = scalar_lea.hbm %s2, %s554
          %s557 = sshll.u32 %s550, 4
          %s558 = int_to_ptr.vmem [resolvable:$true] %s557
          %560 = dma.hbm_to_vmem [thread:$0]  %s555, 16, %s558, %s548
        $region36: #{tpu_custom_call.1} parent=23 // pred_fallthru
          _
        // Predicated region
        $region37: #{tpu_custom_call.1} parent=23 // pred_check
          %p561 = pneg %p150
        $region38: #{tpu_custom_call.1} parent=23 // pred_check_branch
          %563 = sbr.rel (%p561) target = $region40
        $region39: #{tpu_custom_call.1} parent=23 // pred_region
          %s564 = sand.u32 %s40, 1
          %s565 = scalar_lea.sflag [#allocation10], %s564
          %s566 = sand.u32 %s140, 1
          %s567 = scalar_lea.vmem [#allocation9], %s566
          %s569 = ssub.s32 16, 16
          %570 = vsyncadd %s565, %s569
          %s571 = smul.addr %s48, 16
          %s572 = scalar_lea.hbm %s3, %s571
          %s574 = sshll.u32 %s567, 4
          %s575 = int_to_ptr.vmem [resolvable:$true] %s574
          %577 = dma.hbm_to_vmem [thread:$0]  %s572, 16, %s575, %s565
        $region40: #{tpu_custom_call.1} parent=23 // pred_fallthru
          _
        // Predicated region
        $region41: #{tpu_custom_call.1} parent=23 // pred_check
          %p578 = pneg %p176
        $region42: #{tpu_custom_call.1} parent=23 // pred_check_branch
          %580 = sbr.rel (%p578) target = $region44
        $region43: #{tpu_custom_call.1} parent=23 // pred_region
          %s581 = sand.u32 %s40, 1
          %s582 = scalar_lea.sflag [#allocation10], %s581
          %s583 = sand.u32 %s166, 1
          %s584 = smul.addr %s583, 192
          %s585 = scalar_lea.vmem [#allocation11], %s584
          %s587 = ssub.s32 3072, 3072
          %588 = vsyncadd %s582, %s587
          %s589 = smul.addr %s48, 48
          %s590 = smul.addr %s589, 64
          %s591 = scalar_lea.hbm %s4, %s590
          %s592 = sshll.u32 %s585, 4
          %s593 = int_to_ptr.vmem [resolvable:$true] %s592
          %598 = dma.hbm_to_vmem [thread:$0]  %s591, 3072, %s593, %s582, 192, 192, 12
        $region44: #{tpu_custom_call.1} parent=23 // pred_fallthru
          _
        // Predicated region
        $region45: #{tpu_custom_call.1} parent=23 // pred_check
          %p599 = pneg %p202
        $region46: #{tpu_custom_call.1} parent=23 // pred_check_branch
          %601 = sbr.rel (%p599) target = $region48
        $region47: #{tpu_custom_call.1} parent=23 // pred_region
          %p602 = scmp.lt.s32.totalorder %s48, 1
          %s603 = scalar_select %p602, %s48, 1
          %s604 = smul.addr %s603, 3
          %s605 = scalar_lea.vmem %s5, %s604
        $region48: #{tpu_custom_call.1} parent=23 // pred_fallthru
          _
        // Predicated region
        $region49: #{tpu_custom_call.1} parent=23 // pred_check
          %p606 = pneg %p228
        $region50: #{tpu_custom_call.1} parent=23 // pred_check_branch
          %608 = sbr.rel (%p606) target = $region52
        $region51: #{tpu_custom_call.1} parent=23 // pred_region
          %s609 = sand.u32 %s40, 1
          %s610 = scalar_lea.sflag [#allocation13], %s609
          %s611 = sand.u32 %s218, 1
          %s612 = smul.addr %s611, 64
          %s613 = scalar_lea.vmem [#allocation12], %s612
          %s615 = ssub.s32 1024, 1024
          %616 = vsyncadd %s610, %s615
          %s617 = smul.addr %s48, 16
          %s618 = smul.addr %s617, 64
          %s619 = scalar_lea.hbm %s6, %s618
          %s620 = sshll.u32 %s613, 4
          %s621 = int_to_ptr.vmem [resolvable:$true] %s620
          %626 = dma.hbm_to_vmem [thread:$0]  %s619, 1024, %s621, %s610, 64, 64, 4
        $region52: #{tpu_custom_call.1} parent=23 // pred_fallthru
          _
        // Predicated region
        $region53: #{tpu_custom_call.1} parent=23 // pred_check
          %p627 = pneg %p254
        $region54: #{tpu_custom_call.1} parent=23 // pred_check_branch
          %629 = sbr.rel (%p627) target = $region56
        $region55: #{tpu_custom_call.1} parent=23 // pred_region
          %p630 = scmp.lt.s32.totalorder %s48, 1
          %s631 = scalar_select %p630, %s48, 1
          %s632 = scalar_lea.vmem %s7, %s631
        $region56: #{tpu_custom_call.1} parent=23 // pred_fallthru
          _
        // Predicated region
        $region57: #{tpu_custom_call.1} parent=23 // pred_check
          %p633 = pneg %p280
        $region58: #{tpu_custom_call.1} parent=23 // pred_check_branch
          %635 = sbr.rel (%p633) target = $region60
        $region59: #{tpu_custom_call.1} parent=23 // pred_region
          %p636 = scmp.lt.s32.totalorder %s48, 1
          %s637 = scalar_select %p636, %s48, 1
          %s638 = scalar_lea.vmem %s8, %s637
        $region60: #{tpu_custom_call.1} parent=23 // pred_fallthru
          _
        // Predicated region
        $region61: #{tpu_custom_call.1} parent=23 // pred_check
          %p639 = pneg %p306
        $region62: #{tpu_custom_call.1} parent=23 // pred_check_branch
          %641 = sbr.rel (%p639) target = $region64
        $region63: #{tpu_custom_call.1} parent=23 // pred_region
          %p642 = scmp.lt.s32.totalorder %s48, 1
          %s643 = scalar_select %p642, %s48, 1
          %s644 = scalar_lea.vmem %s9, %s643
        $region64: #{tpu_custom_call.1} parent=23 // pred_fallthru
          _
        // Predicated region
        $region65: #{tpu_custom_call.1} parent=23 // pred_check
          %p645 = pneg %p332
        $region66: #{tpu_custom_call.1} parent=23 // pred_check_branch
          %647 = sbr.rel (%p645) target = $region68
        $region67: #{tpu_custom_call.1} parent=23 // pred_region
          %s648 = sand.u32 %s40, 1
          %s649 = scalar_lea.sflag [#allocation13], %s648
          %s650 = sand.u32 %s322, 1
          %s651 = smul.addr %s650, 128
          %s652 = scalar_lea.vmem [#allocation14], %s651
          %s654 = ssub.s32 2048, 2048
          %655 = vsyncadd %s649, %s654
          %s656 = smul.addr %s48, 32
          %s657 = smul.addr %s656, 64
          %s658 = scalar_lea.hbm %s10, %s657
          %s659 = sshll.u32 %s652, 4
          %s660 = int_to_ptr.vmem [resolvable:$true] %s659
          %665 = dma.hbm_to_vmem [thread:$0]  %s658, 2048, %s660, %s649, 128, 128, 8
        $region68: #{tpu_custom_call.1} parent=23 // pred_fallthru
          _
        // Predicated region
        $region69: #{tpu_custom_call.1} parent=23 // pred_check
          %p666 = pneg %p358
        $region70: #{tpu_custom_call.1} parent=23 // pred_check_branch
          %668 = sbr.rel (%p666) target = $region72
        $region71: #{tpu_custom_call.1} parent=23 // pred_region
          %p669 = scmp.lt.s32.totalorder %s48, 1
          %s670 = scalar_select %p669, %s48, 1
          %s671 = smul.addr %s670, 2
          %s672 = scalar_lea.vmem %s11, %s671
        $region72: #{tpu_custom_call.1} parent=23 // pred_fallthru
          _
        // Predicated region
        $region73: #{tpu_custom_call.1} parent=23 // pred_check
          %p673 = pneg %p384
        $region74: #{tpu_custom_call.1} parent=23 // pred_check_branch
          %675 = sbr.rel (%p673) target = $region76
        $region75: #{tpu_custom_call.1} parent=23 // pred_region
          %s676 = sand.u32 %s374, 1
          %s677 = scalar_lea.sflag [#allocation16], %s676
          %s678 = sand.u32 %s374, 1
          %s679 = smul.addr %s678, 128
          %s680 = scalar_lea.vmem [#allocation15], %s679
          %s682 = ssub.s32 2048, 2048
          %683 = vsyncadd %s677, %s682
          %s684 = smul.addr %s48, 32
          %s685 = smul.addr %s684, 64
          %s686 = scalar_lea.hbm %s12, %s685
          %s687 = sshll.u32 %s680, 4
          %s688 = int_to_ptr.vmem [resolvable:$true] %s687
          %693 = dma.hbm_to_vmem [thread:$0]  %s686, 2048, %s688, %s677, 64, 64, 4
        $region76: #{tpu_custom_call.1} parent=23 // pred_fallthru
          _
        // Predicated region
        $region77: #{tpu_custom_call.1} parent=23 // pred_check
          %p694 = pneg %p410
        $region78: #{tpu_custom_call.1} parent=23 // pred_check_branch
          %696 = sbr.rel (%p694) target = $region80
        $region79: #{tpu_custom_call.1} parent=23 // pred_region
          %p697 = scmp.lt.s32.totalorder %s48, 1
          %s698 = scalar_select %p697, %s48, 1
          %s699 = scalar_lea.vmem %s13, %s698
        $region80: #{tpu_custom_call.1} parent=23 // pred_fallthru
          _
      $region24: #{tpu_custom_call.1} parent=5 // pred_fallthru
        _
      %p700 = scmp.le.s32.totalorder 1, %s40
      %p701 = scmp.lt.s32.totalorder %s40, 5
      %p702 = pnand %p700, %p701
      %p703 = pneg %p702
      // Predicated region
      $region81: #{tpu_custom_call.1} parent=5 // pred_check
        _
      $region82: #{tpu_custom_call.1} parent=5 // pred_check_branch
        %705 = sbr.rel (%p702) target = $region84
      $region83: #{tpu_custom_call.1} parent=5 // pred_region
        %s706 = ssub.s32 %s40, 1
        %s707 = sand.u32 %s65, 1
        %s708 = scalar_lea.sflag [#allocation4], %s707
        %s709 = sand.u32 %s65, 1
        %s710 = smul.addr %s709, 8
        %s711 = scalar_lea.vmem [#allocation3], %s710
        // Predicated region
        $region85: #{tpu_custom_call.1} parent=83 // pred_check
          %p712 = pneg %p78
        $region86: #{tpu_custom_call.1} parent=83 // pred_check_branch
          %714 = sbr.rel (%p712) target = $region88
        $region87: #{tpu_custom_call.1} parent=83 // pred_region
          %715 = dma.done %s708, 128
        $region88: #{tpu_custom_call.1} parent=83 // pred_fallthru
          _
        %s716 = sand.u32 %s45, 1
        %s717 = scalar_lea.sflag [#allocation7], %s716
        %s718 = sand.u32 %s91, 1
        %s719 = scalar_lea.vmem [#allocation6], %s718
        // Predicated region
        $region89: #{tpu_custom_call.1} parent=83 // pred_check
          %p720 = pneg %p104
        $region90: #{tpu_custom_call.1} parent=83 // pred_check_branch
          %722 = sbr.rel (%p720) target = $region92
        $region91: #{tpu_custom_call.1} parent=83 // pred_region
          %723 = dma.done %s717, 16
        $region92: #{tpu_custom_call.1} parent=83 // pred_fallthru
          _
        %s724 = sand.u32 %s45, 1
        %s725 = scalar_lea.sflag [#allocation7], %s724
        %s726 = sand.u32 %s117, 1
        %s727 = scalar_lea.vmem [#allocation8], %s726
        // Predicated region
        $region93: #{tpu_custom_call.1} parent=83 // pred_check
          %p728 = pneg %p130
        $region94: #{tpu_custom_call.1} parent=83 // pred_check_branch
          %730 = sbr.rel (%p728) target = $region96
        $region95: #{tpu_custom_call.1} parent=83 // pred_region
          %731 = dma.done %s725, 16
        $region96: #{tpu_custom_call.1} parent=83 // pred_fallthru
          _
        %s732 = sand.u32 %s45, 1
        %s733 = scalar_lea.sflag [#allocation10], %s732
        %s734 = sand.u32 %s143, 1
        %s735 = scalar_lea.vmem [#allocation9], %s734
        // Predicated region
        $region97: #{tpu_custom_call.1} parent=83 // pred_check
          %p736 = pneg %p156
        $region98: #{tpu_custom_call.1} parent=83 // pred_check_branch
          %738 = sbr.rel (%p736) target = $region100
        $region99: #{tpu_custom_call.1} parent=83 // pred_region
          %739 = dma.done %s733, 16
        $region100: #{tpu_custom_call.1} parent=83 // pred_fallthru
          _
        %s740 = sand.u32 %s45, 1
        %s741 = scalar_lea.sflag [#allocation10], %s740
        %s742 = sand.u32 %s169, 1
        %s743 = smul.addr %s742, 192
        %s744 = scalar_lea.vmem [#allocation11], %s743
        // Predicated region
        $region101: #{tpu_custom_call.1} parent=83 // pred_check
          %p745 = pneg %p182
        $region102: #{tpu_custom_call.1} parent=83 // pred_check_branch
          %747 = sbr.rel (%p745) target = $region104
        $region103: #{tpu_custom_call.1} parent=83 // pred_region
          %748 = dma.done %s741, 3072
        $region104: #{tpu_custom_call.1} parent=83 // pred_fallthru
          _
        %s749 = sand.u32 %s45, 1
        %s750 = scalar_lea.sflag [#allocation13], %s749
        %s751 = sand.u32 %s221, 1
        %s752 = smul.addr %s751, 64
        %s753 = scalar_lea.vmem [#allocation12], %s752
        // Predicated region
        $region105: #{tpu_custom_call.1} parent=83 // pred_check
          %p754 = pneg %p234
        $region106: #{tpu_custom_call.1} parent=83 // pred_check_branch
          %756 = sbr.rel (%p754) target = $region108
        $region107: #{tpu_custom_call.1} parent=83 // pred_region
          %757 = dma.done %s750, 1024
        $region108: #{tpu_custom_call.1} parent=83 // pred_fallthru
          _
        %s758 = sand.u32 %s45, 1
        %s759 = scalar_lea.sflag [#allocation13], %s758
        %s760 = sand.u32 %s325, 1
        %s761 = smul.addr %s760, 128
        %s762 = scalar_lea.vmem [#allocation14], %s761
        // Predicated region
        $region109: #{tpu_custom_call.1} parent=83 // pred_check
          %p763 = pneg %p338
        $region110: #{tpu_custom_call.1} parent=83 // pred_check_branch
          %765 = sbr.rel (%p763) target = $region112
        $region111: #{tpu_custom_call.1} parent=83 // pred_region
          %766 = dma.done %s759, 2048
        $region112: #{tpu_custom_call.1} parent=83 // pred_fallthru
          _
        %s767 = sand.u32 %s377, 1
        %s768 = scalar_lea.sflag [#allocation16], %s767
        %s769 = sand.u32 %s377, 1
        %s770 = smul.addr %s769, 128
        %s771 = scalar_lea.vmem [#allocation15], %s770
        // Predicated region
        $region113: #{tpu_custom_call.1} parent=83 // pred_check
          %p772 = pneg %p390
        $region114: #{tpu_custom_call.1} parent=83 // pred_check_branch
          %774 = sbr.rel (%p772) target = $region116
        $region115: #{tpu_custom_call.1} parent=83 // pred_region
          %775 = dma.done %s768, 2048
        $region116: #{tpu_custom_call.1} parent=83 // pred_fallthru
          _
        %s776 = sand.u32 %s65, 1
        %s777 = scalar_lea.sflag [#allocation4], %s776
        %s778 = sand.u32 %s65, 1
        %s779 = smul.addr %s778, 8
        %s780 = scalar_lea.vmem [#allocation3], %s779
        %p781 = pneg %p78
        %p782 = pneg %p75
        %s783 = sand.u32 %s45, 1
        %s784 = scalar_lea.sflag [#allocation7], %s783
        %s785 = sand.u32 %s91, 1
        %s786 = scalar_lea.vmem [#allocation6], %s785
        %p787 = pneg %p104
        %p788 = pneg %p101
        %s789 = sand.u32 %s45, 1
        %s790 = scalar_lea.sflag [#allocation7], %s789
        %s791 = sand.u32 %s117, 1
        %s792 = scalar_lea.vmem [#allocation8], %s791
        %p793 = pneg %p130
        %p794 = pneg %p127
        %s795 = sand.u32 %s45, 1
        %s796 = scalar_lea.sflag [#allocation10], %s795
        %s797 = sand.u32 %s143, 1
        %s798 = scalar_lea.vmem [#allocation9], %s797
        %p799 = pneg %p156
        %p800 = pneg %p153
        %s801 = sand.u32 %s45, 1
        %s802 = scalar_lea.sflag [#allocation10], %s801
        %s803 = sand.u32 %s169, 1
        %s804 = smul.addr %s803, 192
        %s805 = scalar_lea.vmem [#allocation11], %s804
        %p806 = pneg %p182
        %p807 = pneg %p179
        %p808 = scmp.lt.s32.totalorder %s50, 1
        %s809 = scalar_select %p808, %s50, 1
        %s810 = smul.addr %s809, 3
        %s811 = scalar_lea.vmem %s5, %s810
        %p812 = pneg %p208
        %p813 = pneg %p205
        %s814 = sand.u32 %s45, 1
        %s815 = scalar_lea.sflag [#allocation13], %s814
        %s816 = sand.u32 %s221, 1
        %s817 = smul.addr %s816, 64
        %s818 = scalar_lea.vmem [#allocation12], %s817
        %p819 = pneg %p234
        %p820 = pneg %p231
        %p821 = scmp.lt.s32.totalorder %s50, 1
        %s822 = scalar_select %p821, %s50, 1
        %s823 = scalar_lea.vmem %s7, %s822
        %p824 = pneg %p260
        %p825 = pneg %p257
        %p826 = scmp.lt.s32.totalorder %s50, 1
        %s827 = scalar_select %p826, %s50, 1
        %s828 = scalar_lea.vmem %s8, %s827
        %p829 = pneg %p286
        %p830 = pneg %p283
        %p831 = scmp.lt.s32.totalorder %s50, 1
        %s832 = scalar_select %p831, %s50, 1
        %s833 = scalar_lea.vmem %s9, %s832
        %p834 = pneg %p312
        %p835 = pneg %p309
        %s836 = sand.u32 %s45, 1
        %s837 = scalar_lea.sflag [#allocation13], %s836
        %s838 = sand.u32 %s325, 1
        %s839 = smul.addr %s838, 128
        %s840 = scalar_lea.vmem [#allocation14], %s839
        %p841 = pneg %p338
        %p842 = pneg %p335
        %p843 = scmp.lt.s32.totalorder %s50, 1
        %s844 = scalar_select %p843, %s50, 1
        %s845 = smul.addr %s844, 2
        %s846 = scalar_lea.vmem %s11, %s845
        %p847 = pneg %p364
        %p848 = pneg %p361
        %s849 = sand.u32 %s377, 1
        %s850 = scalar_lea.sflag [#allocation16], %s849
        %s851 = sand.u32 %s377, 1
        %s852 = smul.addr %s851, 128
        %s853 = scalar_lea.vmem [#allocation15], %s852
        %p854 = pneg %p390
        %p855 = pneg %p387
        %p856 = scmp.lt.s32.totalorder %s50, 1
        %s857 = scalar_select %p856, %s50, 1
        %s858 = scalar_lea.vmem %s13, %s857
        %p859 = pneg %p416
        %p860 = pneg %p413
        %p861 = pneg %p437
        %p862 = pneg %p434
        %p863 = pneg %p458
        %p864 = pneg %p455
        %p865 = pneg %p484
        %p866 = pneg %p481
        %s867 = sand.u32 %s471, 1
        %s868 = scalar_lea.sflag [#allocation5], %s867
        %s869 = sand.u32 %s471, 1
        %s870 = smul.addr %s869, 8
        %s871 = scalar_lea.vmem [#allocation17], %s870
        %p872 = scmp.lt.s32.totalorder %s50, 1
        %s873 = scalar_select %p872, %s50, 1
        %s874 = smul.addr %s873, 3
        %s875 = scalar_lea.vmem %s5, %s874
        %p876 = scmp.lt.s32.totalorder %s50, 1
        %s877 = scalar_select %p876, %s50, 1
        %s878 = scalar_lea.vmem %s7, %s877
        %p879 = scmp.lt.s32.totalorder %s50, 1
        %s880 = scalar_select %p879, %s50, 1
        %s881 = scalar_lea.vmem %s8, %s880
        %p882 = scmp.lt.s32.totalorder %s50, 1
        %s883 = scalar_select %p882, %s50, 1
        %s884 = scalar_lea.vmem %s9, %s883
        %p885 = scmp.lt.s32.totalorder %s50, 1
        %s886 = scalar_select %p885, %s50, 1
        %s887 = smul.addr %s886, 2
        %s888 = scalar_lea.vmem %s11, %s887
        %p889 = scmp.lt.s32.totalorder %s50, 1
        %s890 = scalar_select %p889, %s50, 1
        %s891 = scalar_lea.vmem %s13, %s890
        %p893 = scmp.eq.s32.totalorder %s50, 0
        // Predicated region
        $region117: #{tpu_custom_call.1} parent=83 // pred_check
          %p894 = pneg %p893
        $region118: #{tpu_custom_call.1} parent=83 // pred_check_branch
          %896 = sbr.rel (%p894) target = $region120
        $region119: #{tpu_custom_call.1} parent=83 // pred_region
          %v897 = vld [vmem:[%s711] sm:$0xff]
          %898 = vst [vmem:[#allocation2] sm:$0xff] %v897
        $region120: #{tpu_custom_call.1} parent=83 // pred_fallthru
          _
        %v899 = vld [vmem:[#allocation2] sm:$0xff]
        %v900 = vld [vmem:[%s719] sm:$0x1]
        %v901 = vld [vmem:[%s727] sm:$0x1]
        %v902 = vld [vmem:[%s735] sm:$0x1]
        %903 = vadd.xlane.f32.xlu0 %v899
        %v904 = vpop.xlane.xlu0 %903
        %v905 = vrcp.pop 128.0
        %v906 = vmul.f32 %v904, %v905
        %v907 = vsub.f32 %v899, %v906
        %v908 = vmul.f32 %v907, %v907
        %909 = vadd.xlane.f32.xlu0 %v908
        %v910 = vpop.xlane.xlu0 %909
        %v911 = vrcp.pop 127.0
        %v912 = vmul.f32 %v910, %v911
        %v914 = vlaneseq
        %v915 = vshrl.u32 %v914, 7
        %v916 = vsub.s32 0, %v915
        %v917 = vrot.slane %v901, %v916
        %v919 = vmul.f32 %v917, %v907
        %v920 = vrsqrt.pop %v912
        %v921 = vmul.f32 %v912, %v920
        %vm922 = vcmp.eq.f32.partialorder %v912, inf
        %v923 = vsel %vm922, %v912, %v921
        %vm924 = vcmp.eq.f32.partialorder %v912, 0.0
        %v925 = vand.u32 %v912, 2147483648
        %v926 = vsel %vm924, %v925, %v923
        %v927 = vadd.f32 %v926, 1e-06
        %v928 = vrcp.pop %v927
        %v929 = vmul.f32 %v919, %v928
        %v931 = vlaneseq
        %v932 = vshrl.u32 %v931, 7
        %v933 = vsub.s32 0, %v932
        %v934 = vrot.slane %v902, %v933
        %v936 = vadd.f32 %v929, %v934
        %v937 = vpack.c.bf16 %v936, %v936
        %v938 = vld [vmem:[%s744] sm:$0xff]
        %v939 = vld [vmem:[%s744 + $0x8] sm:$0xf]
        %v940 = vld [vmem:[%s744 + $0xc] sm:$0xff]
        %v941 = vld [vmem:[%s744 + $0x14] sm:$0xf]
        %v942 = vld [vmem:[%s744 + $0x18] sm:$0xff]
        %v943 = vld [vmem:[%s744 + $0x20] sm:$0xf]
        %v944 = vld [vmem:[%s744 + $0x24] sm:$0xff]
        %v945 = vld [vmem:[%s744 + $0x2c] sm:$0xf]
        %v946 = vld [vmem:[%s744 + $0x30] sm:$0xff]
        %v947 = vld [vmem:[%s744 + $0x38] sm:$0xf]
        %v948 = vld [vmem:[%s744 + $0x3c] sm:$0xff]
        %v949 = vld [vmem:[%s744 + $0x44] sm:$0xf]
        %v950 = vld [vmem:[%s744 + $0x48] sm:$0xff]
        %v951 = vld [vmem:[%s744 + $0x50] sm:$0xf]
        %v952 = vld [vmem:[%s744 + $0x54] sm:$0xff]
        %v953 = vld [vmem:[%s744 + $0x5c] sm:$0xf]
        %v954 = vld [vmem:[%s744 + $0x60] sm:$0xff]
        %v955 = vld [vmem:[%s744 + $0x68] sm:$0xf]
        %v956 = vld [vmem:[%s744 + $0x6c] sm:$0xff]
        %v957 = vld [vmem:[%s744 + $0x74] sm:$0xf]
        %v958 = vld [vmem:[%s744 + $0x78] sm:$0xff]
        %v959 = vld [vmem:[%s744 + $0x80] sm:$0xf]
        %v960 = vld [vmem:[%s744 + $0x84] sm:$0xff]
        %v961 = vld [vmem:[%s744 + $0x8c] sm:$0xf]
        %v962 = vld [vmem:[%s744 + $0x90] sm:$0xff]
        %v963 = vld [vmem:[%s744 + $0x98] sm:$0xf]
        %v964 = vld [vmem:[%s744 + $0x9c] sm:$0xff]
        %v965 = vld [vmem:[%s744 + $0xa4] sm:$0xf]
        %v966 = vld [vmem:[%s744 + $0xa8] sm:$0xff]
        %v967 = vld [vmem:[%s744 + $0xb0] sm:$0xf]
        %v968 = vld [vmem:[%s744 + $0xb4] sm:$0xff]
        %v969 = vld [vmem:[%s744 + $0xbc] sm:$0xf]
        %v970 = vld [vmem:[%s875] sm:$0x7]
        %v972 = vlaneseq
        %v973 = vshrl.u32 %v972, 7
        %v974 = vsub.s32 0, %v973
        %v975 = vrot.slane %v970, %v974
        %v976 = vlaneseq
        %v977 = vshrl.u32 %v976, 7
        %v978 = vsub.s32 1, %v977
        %v979 = vrot.slane %v970, %v978
        %v980 = vlaneseq
        %v981 = vshrl.u32 %v980, 7
        %v982 = vsub.s32 2, %v981
        %v983 = vrot.slane %v970, %v982
        %v1019 = vunpack.c.l.b16 %v938
        %v1020 = vunpack.c.h.b16 %v938
        %v1021 = vunpack.c.l.b16 %v939
        %v1022 = vunpack.c.l.b16 %v940
        %v1023 = vunpack.c.h.b16 %v940
        %v1024 = vunpack.c.l.b16 %v941
        %v1025 = vunpack.c.l.b16 %v942
        %v1026 = vunpack.c.h.b16 %v942
        %v1027 = vunpack.c.l.b16 %v943
        %v1028 = vunpack.c.l.b16 %v944
        %v1029 = vunpack.c.h.b16 %v944
        %v1030 = vunpack.c.l.b16 %v945
        %v1031 = vunpack.c.l.b16 %v946
        %v1032 = vunpack.c.h.b16 %v946
        %v1033 = vunpack.c.l.b16 %v947
        %v1034 = vunpack.c.l.b16 %v948
        %v1035 = vunpack.c.h.b16 %v948
        %v1036 = vunpack.c.l.b16 %v949
        %v1037 = vunpack.c.l.b16 %v950
        %v1038 = vunpack.c.h.b16 %v950
        %v1039 = vunpack.c.l.b16 %v951
        %v1040 = vunpack.c.l.b16 %v952
        %v1041 = vunpack.c.h.b16 %v952
        %v1042 = vunpack.c.l.b16 %v953
        %v1043 = vunpack.c.l.b16 %v954
        %v1044 = vunpack.c.h.b16 %v954
        %v1045 = vunpack.c.l.b16 %v955
        %v1046 = vunpack.c.l.b16 %v956
        %v1047 = vunpack.c.h.b16 %v956
        %v1048 = vunpack.c.l.b16 %v957
        %v1049 = vunpack.c.l.b16 %v958
        %v1050 = vunpack.c.h.b16 %v958
        %v1051 = vunpack.c.l.b16 %v959
        %v1052 = vunpack.c.l.b16 %v960
        %v1053 = vunpack.c.h.b16 %v960
        %v1054 = vunpack.c.l.b16 %v961
        %v1055 = vunpack.c.l.b16 %v962
        %v1056 = vunpack.c.h.b16 %v962
        %v1057 = vunpack.c.l.b16 %v963
        %v1058 = vunpack.c.l.b16 %v964
        %v1059 = vunpack.c.h.b16 %v964
        %v1060 = vunpack.c.l.b16 %v965
        %v1061 = vunpack.c.l.b16 %v966
        %v1062 = vunpack.c.h.b16 %v966
        %v1063 = vunpack.c.l.b16 %v967
        %v1064 = vunpack.c.l.b16 %v968
        %v1065 = vunpack.c.h.b16 %v968
        %v1066 = vunpack.c.l.b16 %v969
        %v1067 = vpack.c.b16 %v1022, %v1019
        %v1068 = vpack.c.b16 %v1023, %v1020
        %v1069 = vpack.c.b16 %v1024, %v1021
        %v1070 = vpack.c.b16 %v1028, %v1025
        %v1071 = vpack.c.b16 %v1029, %v1026
        %v1072 = vpack.c.b16 %v1030, %v1027
        %v1073 = vpack.c.b16 %v1034, %v1031
        %v1074 = vpack.c.b16 %v1035, %v1032
        %v1075 = vpack.c.b16 %v1036, %v1033
        %v1076 = vpack.c.b16 %v1040, %v1037
        %v1077 = vpack.c.b16 %v1041, %v1038
        %v1078 = vpack.c.b16 %v1042, %v1039
        %v1079 = vpack.c.b16 %v1046, %v1043
        %v1080 = vpack.c.b16 %v1047, %v1044
        %v1081 = vpack.c.b16 %v1048, %v1045
        %v1082 = vpack.c.b16 %v1052, %v1049
        %v1083 = vpack.c.b16 %v1053, %v1050
        %v1084 = vpack.c.b16 %v1054, %v1051
        %v1085 = vpack.c.b16 %v1058, %v1055
        %v1086 = vpack.c.b16 %v1059, %v1056
        %v1087 = vpack.c.b16 %v1060, %v1057
        %v1088 = vpack.c.b16 %v1064, %v1061
        %v1089 = vpack.c.b16 %v1065, %v1062
        %v1090 = vpack.c.b16 %v1066, %v1063
        %1115 = vmatprep.subr.bf16.mxu0 %v1068
        %1116 = vmatpush1.bf16.msra.mxu0 %v1067
        %1117 = vmatprep.subr.bf16.mxu0 %v1071
        %1118 = vmatpush1.bf16.msra.mxu0 %v1070
        %1119 = vmatprep.subr.bf16.mxu0 %v1074
        %1120 = vmatpush1.bf16.msra.mxu0 %v1073
        %1121 = vmatprep.subr.bf16.mxu0 %v1077
        %1122 = vmatpush1.bf16.msra.mxu0 %v1076
        %1123 = vmatprep.subr.bf16.mxu0 %v1080
        %1124 = vmatpush1.bf16.msra.mxu0 %v1079
        %1125 = vmatprep.subr.bf16.mxu0 %v1083
        %1126 = vmatpush1.bf16.msra.mxu0 %v1082
        %1127 = vmatprep.subr.bf16.mxu0 %v1086
        %1128 = vmatpush1.bf16.msra.mxu0 %v1085
        %1129 = vmatprep.subr.bf16.mxu0 %v1089
        %1130 = vmatpush1.bf16.msra.mxu0 %v1088
        %1131 = vmatprep.subr.bf16.mxu0 0
        %1132 = vmatpush1.bf16.msra.mxu0 0
        %1133 = vmatprep.subr.bf16.mxu0 0
        %1134 = vmatpush1.bf16.msra.mxu0 0
        %1135 = vmatprep.subr.bf16.mxu0 0
        %1136 = vmatpush1.bf16.msra.mxu0 0
        %1137 = vmatprep.subr.bf16.mxu0 0
        %1138 = vmatpush1.bf16.msra.mxu0 0
        %1139 = vmatprep.subr.bf16.mxu0 0
        %1140 = vmatpush1.bf16.msra.mxu0 0
        %1141 = vmatprep.subr.bf16.mxu0 0
        %1142 = vmatpush1.bf16.msra.mxu0 0
        %1143 = vmatprep.subr.bf16.mxu0 0
        %1144 = vmatpush1.bf16.msra.mxu0 0
        %1145 = vmatprep.subr.bf16.mxu0 0
        %1146 = vmatpush1.bf16.msra.mxu0 0
        %1147 = vmatprep.mubr.bf16.mxu0 0
        %1148 = vmatmul.mubr.bf16.gmra.mrb[0].mxu0 %v937
        %v1149 = vpop.f32.mrb[0].mxu0
        %v1150 = vadd.f32 %v975, %v1149
        %v1151 = vpop.f32.mrb[0].mxu0
        %v1152 = vadd.f32 %v979, %v1151
        %v1153 = vpop.f32.mrb[0].mxu0
        %v1154 = vpop.f32.mrb[0].mxu0
        %1155 = vdwg.mxu0
        %1156 = vmatprep.subr.bf16.mxu0 0
        %1157 = vmatpush1.bf16.msra.mxu0 %v1069
        %1158 = vmatprep.subr.bf16.mxu0 0
        %1159 = vmatpush1.bf16.msra.mxu0 %v1072
        %1160 = vmatprep.subr.bf16.mxu0 0
        %1161 = vmatpush1.bf16.msra.mxu0 %v1075
        %1162 = vmatprep.subr.bf16.mxu0 0
        %1163 = vmatpush1.bf16.msra.mxu0 %v1078
        %1164 = vmatprep.subr.bf16.mxu0 0
        %1165 = vmatpush1.bf16.msra.mxu0 %v1081
        %1166 = vmatprep.subr.bf16.mxu0 0
        %1167 = vmatpush1.bf16.msra.mxu0 %v1084
        %1168 = vmatprep.subr.bf16.mxu0 0
        %1169 = vmatpush1.bf16.msra.mxu0 %v1087
        %1170 = vmatprep.subr.bf16.mxu0 0
        %1171 = vmatpush1.bf16.msra.mxu0 %v1090
        %1172 = vmatprep.subr.bf16.mxu0 0
        %1173 = vmatpush1.bf16.msra.mxu0 0
        %1174 = vmatprep.subr.bf16.mxu0 0
        %1175 = vmatpush1.bf16.msra.mxu0 0
        %1176 = vmatprep.subr.bf16.mxu0 0
        %1177 = vmatpush1.bf16.msra.mxu0 0
        %1178 = vmatprep.subr.bf16.mxu0 0
        %1179 = vmatpush1.bf16.msra.mxu0 0
        %1180 = vmatprep.subr.bf16.mxu0 0
        %1181 = vmatpush1.bf16.msra.mxu0 0
        %1182 = vmatprep.subr.bf16.mxu0 0
        %1183 = vmatpush1.bf16.msra.mxu0 0
        %1184 = vmatprep.subr.bf16.mxu0 0
        %1185 = vmatpush1.bf16.msra.mxu0 0
        %1186 = vmatprep.subr.bf16.mxu0 0
        %1187 = vmatpush1.bf16.msra.mxu0 0
        %1188 = vmatprep.mubr.bf16.mxu0 0
        %1189 = vmatmul.mubr.bf16.gmra.mrb[0].mxu0 %v937
        %v1190 = vpop.f32.mrb[0].mxu0
        %v1191 = vadd.f32 %v983, %v1190
        %v1192 = vpop.f32.mrb[0].mxu0
        %v1193 = vpop.f32.mrb[0].mxu0
        %v1194 = vpop.f32.mrb[0].mxu0
        %1195 = vdwg.mxu0
        %v1196 = vld [vmem:[%s753] sm:$0xf]
        %v1197 = vld [vmem:[%s753 + $0x4] sm:$0xf]
        %v1198 = vld [vmem:[%s753 + $0x8] sm:$0xf]
        %v1199 = vld [vmem:[%s753 + $0xc] sm:$0xf]
        %v1200 = vld [vmem:[%s753 + $0x10] sm:$0xf]
        %v1201 = vld [vmem:[%s753 + $0x14] sm:$0xf]
        %v1202 = vld [vmem:[%s753 + $0x18] sm:$0xf]
        %v1203 = vld [vmem:[%s753 + $0x1c] sm:$0xf]
        %v1204 = vld [vmem:[%s753 + $0x20] sm:$0xf]
        %v1205 = vld [vmem:[%s753 + $0x24] sm:$0xf]
        %v1206 = vld [vmem:[%s753 + $0x28] sm:$0xf]
        %v1207 = vld [vmem:[%s753 + $0x2c] sm:$0xf]
        %v1208 = vld [vmem:[%s753 + $0x30] sm:$0xf]
        %v1209 = vld [vmem:[%s753 + $0x34] sm:$0xf]
        %v1210 = vld [vmem:[%s753 + $0x38] sm:$0xf]
        %v1211 = vld [vmem:[%s753 + $0x3c] sm:$0xf]
        %v1212 = vld [vmem:[%s878] sm:$0x1]
        %v1213 = vpack.c.bf16 %v1150, %v1150
        %v1214 = vpack.c.bf16 %v1152, %v1152
        %v1215 = vpack.c.bf16 %v1191, %v1191
        %vm1216 = vcmask 261120
        %v1218 = vsel %vm1216, %v1213, 0
        %v1221 = vsel %vm1216, %v1214, 0
        %1223 = vmatprep.subr.bf16.mxu0 0
        %1224 = vmatpush1.bf16.xpose.msra.mxu0 %v1221
        %1225 = vmatprep.subr.bf16.mxu0 0
        %1226 = vmatpush1.bf16.xpose.msra.mxu0 0
        %1227 = vmatprep.subr.bf16.mxu0 0
        %1228 = vmatpush1.bf16.xpose.msra.mxu0 0
        %1229 = vmatprep.subr.bf16.mxu0 0
        %1230 = vmatpush1.bf16.xpose.msra.mxu0 0
        %1231 = vmatprep.subr.bf16.mxu0 0
        %1232 = vmatpush1.bf16.xpose.msra.mxu0 0
        %1233 = vmatprep.subr.bf16.mxu0 0
        %1234 = vmatpush1.bf16.xpose.msra.mxu0 0
        %1235 = vmatprep.subr.bf16.mxu0 0
        %1236 = vmatpush1.bf16.xpose.msra.mxu0 0
        %1237 = vmatprep.subr.bf16.mxu0 0
        %1238 = vmatpush1.bf16.xpose.msra.mxu0 0
        %1239 = vmatprep.subr.bf16.mxu0 0
        %1240 = vmatpush1.bf16.xpose.msra.mxu0 0
        %1241 = vmatprep.subr.bf16.mxu0 0
        %1242 = vmatpush1.bf16.xpose.msra.mxu0 0
        %1243 = vmatprep.subr.bf16.mxu0 0
        %1244 = vmatpush1.bf16.xpose.msra.mxu0 0
        %1245 = vmatprep.subr.bf16.mxu0 0
        %1246 = vmatpush1.bf16.xpose.msra.mxu0 0
        %1247 = vmatprep.subr.bf16.mxu0 0
        %1248 = vmatpush1.bf16.xpose.msra.mxu0 0
        %1249 = vmatprep.subr.bf16.mxu0 0
        %1250 = vmatpush1.bf16.xpose.msra.mxu0 0
        %1251 = vmatprep.subr.bf16.mxu0 0
        %1252 = vmatpush1.bf16.xpose.msra.mxu0 0
        %1253 = vmatprep.subr.bf16.mxu0 0
        %1254 = vmatpush1.bf16.xpose.msra.mxu0 0
        %1255 = vmatprep.mubr.bf16.mxu0 0
        %1256 = vmatmul.mubr.bf16.gmra.mrb[0].mxu0 %v1218
        %v1257 = vpop.f32.mrb[0].mxu0
        %v1258 = vadd.f32 0.0, %v1257
        %v1259 = vpop.f32.mrb[0].mxu0
        %v1260 = vpop.f32.mrb[0].mxu0
        %v1261 = vpop.f32.mrb[0].mxu0
        %1262 = vdwg.mxu0
        %vm1263 = vcmp.eq.f32.partialorder %v900, 0.0
        %v1264 = vsel %vm1263, 1, 0
        %v1265 = vlaneseq
        %v1266 = vshrl.u32 %v1265, 7
        %v1267 = vsub.s32 0, %v1266
        %v1268 = vrot.slane %v1264, %v1267
        %vm1269 = vcmp.eq.s32.totalorder %v1268, 1
        %v1270 = vsel %vm1269, -1e+09, %v1258
        %vm1271 = vcmask 64512
        %v1272 = vsel %vm1271, %v1270, -inf
        %1273 = vmax.xlane.f32.xlu0 %v1272
        %v1274 = vpop.xlane.xlu0 %1273
        %v1275 = vsub.f32 %v1270, %v1274
        %v1276 = vmul.f32 %v1275, 1.442695
        %v1277 = vpow.pop %v1276
        %v1278 = vsel %vm1271, %v1277, 0.0
        %1279 = vadd.xlane.f32.xlu0 %v1278
        %v1280 = vpop.xlane.xlu0 %1279
        %v1281 = vrcp.pop %v1280
        %v1282 = vmul.f32 %v1277, %v1281
        %v1283 = vpack.c.bf16 %v1282, %v1282
        %v1285 = vsel %vm1271, %v1283, 0
        %vm1287 = vcmask 1043456
        %v1289 = vsel %vm1287, %v1215, 0
        %1291 = vmatprep.subr.bf16.mxu0 0
        %1292 = vmatpush1.bf16.msra.mxu0 %v1289
        %1293 = vmatprep.subr.bf16.mxu0 0
        %1294 = vmatpush1.bf16.msra.mxu0 0
        %1295 = vmatprep.subr.bf16.mxu0 0
        %1296 = vmatpush1.bf16.msra.mxu0 0
        %1297 = vmatprep.subr.bf16.mxu0 0
        %1298 = vmatpush1.bf16.msra.mxu0 0
        %1299 = vmatprep.subr.bf16.mxu0 0
        %1300 = vmatpush1.bf16.msra.mxu0 0
        %1301 = vmatprep.subr.bf16.mxu0 0
        %1302 = vmatpush1.bf16.msra.mxu0 0
        %1303 = vmatprep.subr.bf16.mxu0 0
        %1304 = vmatpush1.bf16.msra.mxu0 0
        %1305 = vmatprep.subr.bf16.mxu0 0
        %1306 = vmatpush1.bf16.msra.mxu0 0
        %1307 = vmatprep.subr.bf16.mxu0 0
        %1308 = vmatpush1.bf16.msra.mxu0 0
        %1309 = vmatprep.subr.bf16.mxu0 0
        %1310 = vmatpush1.bf16.msra.mxu0 0
        %1311 = vmatprep.subr.bf16.mxu0 0
        %1312 = vmatpush1.bf16.msra.mxu0 0
        %1313 = vmatprep.subr.bf16.mxu0 0
        %1314 = vmatpush1.bf16.msra.mxu0 0
        %1315 = vmatprep.subr.bf16.mxu0 0
        %1316 = vmatpush1.bf16.msra.mxu0 0
        %1317 = vmatprep.subr.bf16.mxu0 0
        %1318 = vmatpush1.bf16.msra.mxu0 0
        %1319 = vmatprep.subr.bf16.mxu0 0
        %1320 = vmatpush1.bf16.msra.mxu0 0
        %1321 = vmatprep.subr.bf16.mxu0 0
        %1322 = vmatpush1.bf16.msra.mxu0 0
        %1323 = vmatprep.mubr.bf16.mxu0 0
        %1324 = vmatmul.mubr.bf16.gmra.mrb[0].mxu0 %v1285
        %v1325 = vpop.f32.mrb[0].mxu0
        %v1326 = vadd.f32 0.0, %v1325
        %v1327 = vpop.f32.mrb[0].mxu0
        %v1328 = vpop.f32.mrb[0].mxu0
        %v1329 = vpop.f32.mrb[0].mxu0
        %1330 = vdwg.mxu0
        %v1331 = vpack.c.bf16 %v1326, %v1326
        %1333 = vrot.lane.b32.xlu0 %v1213, 96
        %v1334 = vpop.permute.xlu0 %1333
        %1336 = vrot.lane.b32.xlu0 %v1214, 96
        %v1337 = vpop.permute.xlu0 %1336
        %v1339 = vsel %vm1216, %v1334, 0
        %v1342 = vsel %vm1216, %v1337, 0
        %1344 = vmatprep.subr.bf16.mxu0 0
        %1345 = vmatpush1.bf16.xpose.msra.mxu0 %v1342
        %1346 = vmatprep.subr.bf16.mxu0 0
        %1347 = vmatpush1.bf16.xpose.msra.mxu0 0
        %1348 = vmatprep.subr.bf16.mxu0 0
        %1349 = vmatpush1.bf16.xpose.msra.mxu0 0
        %1350 = vmatprep.subr.bf16.mxu0 0
        %1351 = vmatpush1.bf16.xpose.msra.mxu0 0
        %1352 = vmatprep.subr.bf16.mxu0 0
        %1353 = vmatpush1.bf16.xpose.msra.mxu0 0
        %1354 = vmatprep.subr.bf16.mxu0 0
        %1355 = vmatpush1.bf16.xpose.msra.mxu0 0
        %1356 = vmatprep.subr.bf16.mxu0 0
        %1357 = vmatpush1.bf16.xpose.msra.mxu0 0
        %1358 = vmatprep.subr.bf16.mxu0 0
        %1359 = vmatpush1.bf16.xpose.msra.mxu0 0
        %1360 = vmatprep.subr.bf16.mxu0 0
        %1361 = vmatpush1.bf16.xpose.msra.mxu0 0
        %1362 = vmatprep.subr.bf16.mxu0 0
        %1363 = vmatpush1.bf16.xpose.msra.mxu0 0
        %1364 = vmatprep.subr.bf16.mxu0 0
        %1365 = vmatpush1.bf16.xpose.msra.mxu0 0
        %1366 = vmatprep.subr.bf16.mxu0 0
        %1367 = vmatpush1.bf16.xpose.msra.mxu0 0
        %1368 = vmatprep.subr.bf16.mxu0 0
        %1369 = vmatpush1.bf16.xpose.msra.mxu0 0
        %1370 = vmatprep.subr.bf16.mxu0 0
        %1371 = vmatpush1.bf16.xpose.msra.mxu0 0
        %1372 = vmatprep.subr.bf16.mxu0 0
        %1373 = vmatpush1.bf16.xpose.msra.mxu0 0
        %1374 = vmatprep.subr.bf16.mxu0 0
        %1375 = vmatpush1.bf16.xpose.msra.mxu0 0
        %1376 = vmatprep.mubr.bf16.mxu0 0
        %1377 = vmatmul.mubr.bf16.gmra.mrb[0].mxu0 %v1339
        %v1378 = vpop.f32.mrb[0].mxu0
        %v1379 = vadd.f32 0.0, %v1378
        %v1380 = vpop.f32.mrb[0].mxu0
        %v1381 = vpop.f32.mrb[0].mxu0
        %v1382 = vpop.f32.mrb[0].mxu0
        %1383 = vdwg.mxu0
        %v1384 = vsel %vm1269, -1e+09, %v1379
        %v1385 = vsel %vm1271, %v1384, -inf
        %1386 = vmax.xlane.f32.xlu0 %v1385
        %v1387 = vpop.xlane.xlu0 %1386
        %v1388 = vsub.f32 %v1384, %v1387
        %v1389 = vmul.f32 %v1388, 1.442695
        %v1390 = vpow.pop %v1389
        %v1391 = vsel %vm1271, %v1390, 0.0
        %1392 = vadd.xlane.f32.xlu0 %v1391
        %v1393 = vpop.xlane.xlu0 %1392
        %v1394 = vrcp.pop %v1393
        %v1395 = vmul.f32 %v1390, %v1394
        %v1396 = vpack.c.bf16 %v1395, %v1395
        %1398 = vrot.lane.b32.xlu0 %v1215, 96
        %v1399 = vpop.permute.xlu0 %1398
        %v1401 = vsel %vm1271, %v1396, 0
        %v1404 = vsel %vm1287, %v1399, 0
        %1406 = vmatprep.subr.bf16.mxu0 0
        %1407 = vmatpush1.bf16.msra.mxu0 %v1404
        %1408 = vmatprep.subr.bf16.mxu0 0
        %1409 = vmatpush1.bf16.msra.mxu0 0
        %1410 = vmatprep.subr.bf16.mxu0 0
        %1411 = vmatpush1.bf16.msra.mxu0 0
        %1412 = vmatprep.subr.bf16.mxu0 0
        %1413 = vmatpush1.bf16.msra.mxu0 0
        %1414 = vmatprep.subr.bf16.mxu0 0
        %1415 = vmatpush1.bf16.msra.mxu0 0
        %1416 = vmatprep.subr.bf16.mxu0 0
        %1417 = vmatpush1.bf16.msra.mxu0 0
        %1418 = vmatprep.subr.bf16.mxu0 0
        %1419 = vmatpush1.bf16.msra.mxu0 0
        %1420 = vmatprep.subr.bf16.mxu0 0
        %1421 = vmatpush1.bf16.msra.mxu0 0
        %1422 = vmatprep.subr.bf16.mxu0 0
        %1423 = vmatpush1.bf16.msra.mxu0 0
        %1424 = vmatprep.subr.bf16.mxu0 0
        %1425 = vmatpush1.bf16.msra.mxu0 0
        %1426 = vmatprep.subr.bf16.mxu0 0
        %1427 = vmatpush1.bf16.msra.mxu0 0
        %1428 = vmatprep.subr.bf16.mxu0 0
        %1429 = vmatpush1.bf16.msra.mxu0 0
        %1430 = vmatprep.subr.bf16.mxu0 0
        %1431 = vmatpush1.bf16.msra.mxu0 0
        %1432 = vmatprep.subr.bf16.mxu0 0
        %1433 = vmatpush1.bf16.msra.mxu0 0
        %1434 = vmatprep.subr.bf16.mxu0 0
        %1435 = vmatpush1.bf16.msra.mxu0 0
        %1436 = vmatprep.subr.bf16.mxu0 0
        %1437 = vmatpush1.bf16.msra.mxu0 0
        %1438 = vmatprep.mubr.bf16.mxu0 0
        %1439 = vmatmul.mubr.bf16.gmra.mrb[0].mxu0 %v1401
        %v1440 = vpop.f32.mrb[0].mxu0
        %v1441 = vadd.f32 0.0, %v1440
        %v1442 = vpop.f32.mrb[0].mxu0
        %v1443 = vpop.f32.mrb[0].mxu0
        %v1444 = vpop.f32.mrb[0].mxu0
        %1445 = vdwg.mxu0
        %v1446 = vpack.c.bf16 %v1441, %v1441
        %v1451 = vunpack.c.l.b16 %v1200
        %v1452 = vunpack.c.l.b16 %v1201
        %v1453 = vunpack.c.l.b16 %v1202
        %v1454 = vunpack.c.l.b16 %v1203
        %v1455 = vpack.c.b16 %v1452, %v1451
        %v1456 = vpack.c.b16 %v1454, %v1453
        %v1460 = vsel %vm1216, %v1446, 0
        %1462 = vmatprep.subr.bf16.mxu0 0
        %1463 = vmatpush1.bf16.msra.mxu0 %v1455
        %1464 = vmatprep.subr.bf16.mxu0 0
        %1465 = vmatpush1.bf16.msra.mxu0 %v1456
        %1466 = vmatprep.subr.bf16.mxu0 0
        %1467 = vmatpush1.bf16.msra.mxu0 0
        %1468 = vmatprep.subr.bf16.mxu0 0
        %1469 = vmatpush1.bf16.msra.mxu0 0
        %1470 = vmatprep.subr.bf16.mxu0 0
        %1471 = vmatpush1.bf16.msra.mxu0 0
        %1472 = vmatprep.subr.bf16.mxu0 0
        %1473 = vmatpush1.bf16.msra.mxu0 0
        %1474 = vmatprep.subr.bf16.mxu0 0
        %1475 = vmatpush1.bf16.msra.mxu0 0
        %1476 = vmatprep.subr.bf16.mxu0 0
        %1477 = vmatpush1.bf16.msra.mxu0 0
        %1478 = vmatprep.subr.bf16.mxu0 0
        %1479 = vmatpush1.bf16.msra.mxu0 0
        %1480 = vmatprep.subr.bf16.mxu0 0
        %1481 = vmatpush1.bf16.msra.mxu0 0
        %1482 = vmatprep.subr.bf16.mxu0 0
        %1483 = vmatpush1.bf16.msra.mxu0 0
        %1484 = vmatprep.subr.bf16.mxu0 0
        %1485 = vmatpush1.bf16.msra.mxu0 0
        %1486 = vmatprep.subr.bf16.mxu0 0
        %1487 = vmatpush1.bf16.msra.mxu0 0
        %1488 = vmatprep.subr.bf16.mxu0 0
        %1489 = vmatpush1.bf16.msra.mxu0 0
        %1490 = vmatprep.subr.bf16.mxu0 0
        %1491 = vmatpush1.bf16.msra.mxu0 0
        %1492 = vmatprep.subr.bf16.mxu0 0
        %1493 = vmatpush1.bf16.msra.mxu0 0
        %1494 = vmatprep.mubr.bf16.mxu0 0
        %1495 = vmatmul.mubr.bf16.gmra.mrb[0].mxu0 %v1460
        %v1496 = vpop.f32.mrb[0].mxu0
        %v1497 = vadd.f32 0.0, %v1496
        %v1498 = vpop.f32.mrb[0].mxu0
        %v1499 = vpop.f32.mrb[0].mxu0
        %v1500 = vpop.f32.mrb[0].mxu0
        %1501 = vdwg.mxu0
        %v1506 = vunpack.c.l.b16 %v1196
        %v1507 = vunpack.c.l.b16 %v1197
        %v1508 = vunpack.c.l.b16 %v1198
        %v1509 = vunpack.c.l.b16 %v1199
        %v1510 = vpack.c.b16 %v1507, %v1506
        %v1511 = vpack.c.b16 %v1509, %v1508
        %v1515 = vsel %vm1216, %v1331, 0
        %1517 = vmatprep.subr.bf16.mxu0 0
        %1518 = vmatpush1.bf16.msra.mxu0 %v1510
        %1519 = vmatprep.subr.bf16.mxu0 0
        %1520 = vmatpush1.bf16.msra.mxu0 %v1511
        %1521 = vmatprep.subr.bf16.mxu0 0
        %1522 = vmatpush1.bf16.msra.mxu0 0
        %1523 = vmatprep.subr.bf16.mxu0 0
        %1524 = vmatpush1.bf16.msra.mxu0 0
        %1525 = vmatprep.subr.bf16.mxu0 0
        %1526 = vmatpush1.bf16.msra.mxu0 0
        %1527 = vmatprep.subr.bf16.mxu0 0
        %1528 = vmatpush1.bf16.msra.mxu0 0
        %1529 = vmatprep.subr.bf16.mxu0 0
        %1530 = vmatpush1.bf16.msra.mxu0 0
        %1531 = vmatprep.subr.bf16.mxu0 0
        %1532 = vmatpush1.bf16.msra.mxu0 0
        %1533 = vmatprep.subr.bf16.mxu0 0
        %1534 = vmatpush1.bf16.msra.mxu0 0
        %1535 = vmatprep.subr.bf16.mxu0 0
        %1536 = vmatpush1.bf16.msra.mxu0 0
        %1537 = vmatprep.subr.bf16.mxu0 0
        %1538 = vmatpush1.bf16.msra.mxu0 0
        %1539 = vmatprep.subr.bf16.mxu0 0
        %1540 = vmatpush1.bf16.msra.mxu0 0
        %1541 = vmatprep.subr.bf16.mxu0 0
        %1542 = vmatpush1.bf16.msra.mxu0 0
        %1543 = vmatprep.subr.bf16.mxu0 0
        %1544 = vmatpush1.bf16.msra.mxu0 0
        %1545 = vmatprep.subr.bf16.mxu0 0
        %1546 = vmatpush1.bf16.msra.mxu0 0
        %1547 = vmatprep.subr.bf16.mxu0 0
        %1548 = vmatpush1.bf16.msra.mxu0 0
        %1549 = vmatprep.mubr.bf16.mxu0 0
        %1550 = vmatmul.mubr.bf16.gmra.mrb[0].mxu0 %v1515
        %v1551 = vpop.f32.mrb[0].mxu0
        %v1552 = vadd.f32 %v1497, %v1551
        %v1553 = vpop.f32.mrb[0].mxu0
        %v1554 = vpop.f32.mrb[0].mxu0
        %v1555 = vpop.f32.mrb[0].mxu0
        %1556 = vdwg.mxu0
        %1557 = vrot.lane.b32.xlu0 %v1213, 64
        %v1558 = vpop.permute.xlu0 %1557
        %1559 = vrot.lane.b32.xlu0 %v1214, 64
        %v1560 = vpop.permute.xlu0 %1559
        %v1562 = vsel %vm1216, %v1558, 0
        %v1565 = vsel %vm1216, %v1560, 0
        %1567 = vmatprep.subr.bf16.mxu0 0
        %1568 = vmatpush1.bf16.xpose.msra.mxu0 %v1565
        %1569 = vmatprep.subr.bf16.mxu0 0
        %1570 = vmatpush1.bf16.xpose.msra.mxu0 0
        %1571 = vmatprep.subr.bf16.mxu0 0
        %1572 = vmatpush1.bf16.xpose.msra.mxu0 0
        %1573 = vmatprep.subr.bf16.mxu0 0
        %1574 = vmatpush1.bf16.xpose.msra.mxu0 0
        %1575 = vmatprep.subr.bf16.mxu0 0
        %1576 = vmatpush1.bf16.xpose.msra.mxu0 0
        %1577 = vmatprep.subr.bf16.mxu0 0
        %1578 = vmatpush1.bf16.xpose.msra.mxu0 0
        %1579 = vmatprep.subr.bf16.mxu0 0
        %1580 = vmatpush1.bf16.xpose.msra.mxu0 0
        %1581 = vmatprep.subr.bf16.mxu0 0
        %1582 = vmatpush1.bf16.xpose.msra.mxu0 0
        %1583 = vmatprep.subr.bf16.mxu0 0
        %1584 = vmatpush1.bf16.xpose.msra.mxu0 0
        %1585 = vmatprep.subr.bf16.mxu0 0
        %1586 = vmatpush1.bf16.xpose.msra.mxu0 0
        %1587 = vmatprep.subr.bf16.mxu0 0
        %1588 = vmatpush1.bf16.xpose.msra.mxu0 0
        %1589 = vmatprep.subr.bf16.mxu0 0
        %1590 = vmatpush1.bf16.xpose.msra.mxu0 0
        %1591 = vmatprep.subr.bf16.mxu0 0
        %1592 = vmatpush1.bf16.xpose.msra.mxu0 0
        %1593 = vmatprep.subr.bf16.mxu0 0
        %1594 = vmatpush1.bf16.xpose.msra.mxu0 0
        %1595 = vmatprep.subr.bf16.mxu0 0
        %1596 = vmatpush1.bf16.xpose.msra.mxu0 0
        %1597 = vmatprep.subr.bf16.mxu0 0
        %1598 = vmatpush1.bf16.xpose.msra.mxu0 0
        %1599 = vmatprep.mubr.bf16.mxu0 0
        %1600 = vmatmul.mubr.bf16.gmra.mrb[0].mxu0 %v1562
        %v1601 = vpop.f32.mrb[0].mxu0
        %v1602 = vadd.f32 0.0, %v1601
        %v1603 = vpop.f32.mrb[0].mxu0
        %v1604 = vpop.f32.mrb[0].mxu0
        %v1605 = vpop.f32.mrb[0].mxu0
        %1606 = vdwg.mxu0
        %v1607 = vsel %vm1269, -1e+09, %v1602
        %v1608 = vsel %vm1271, %v1607, -inf
        %1609 = vmax.xlane.f32.xlu0 %v1608
        %v1610 = vpop.xlane.xlu0 %1609
        %v1611 = vsub.f32 %v1607, %v1610
        %v1612 = vmul.f32 %v1611, 1.442695
        %v1613 = vpow.pop %v1612
        %v1614 = vsel %vm1271, %v1613, 0.0
        %1615 = vadd.xlane.f32.xlu0 %v1614
        %v1616 = vpop.xlane.xlu0 %1615
        %v1617 = vrcp.pop %v1616
        %v1618 = vmul.f32 %v1613, %v1617
        %v1619 = vpack.c.bf16 %v1618, %v1618
        %1620 = vrot.lane.b32.xlu0 %v1215, 64
        %v1621 = vpop.permute.xlu0 %1620
        %v1623 = vsel %vm1271, %v1619, 0
        %v1626 = vsel %vm1287, %v1621, 0
        %1628 = vmatprep.subr.bf16.mxu0 0
        %1629 = vmatpush1.bf16.msra.mxu0 %v1626
        %1630 = vmatprep.subr.bf16.mxu0 0
        %1631 = vmatpush1.bf16.msra.mxu0 0
        %1632 = vmatprep.subr.bf16.mxu0 0
        %1633 = vmatpush1.bf16.msra.mxu0 0
        %1634 = vmatprep.subr.bf16.mxu0 0
        %1635 = vmatpush1.bf16.msra.mxu0 0
        %1636 = vmatprep.subr.bf16.mxu0 0
        %1637 = vmatpush1.bf16.msra.mxu0 0
        %1638 = vmatprep.subr.bf16.mxu0 0
        %1639 = vmatpush1.bf16.msra.mxu0 0
        %1640 = vmatprep.subr.bf16.mxu0 0
        %1641 = vmatpush1.bf16.msra.mxu0 0
        %1642 = vmatprep.subr.bf16.mxu0 0
        %1643 = vmatpush1.bf16.msra.mxu0 0
        %1644 = vmatprep.subr.bf16.mxu0 0
        %1645 = vmatpush1.bf16.msra.mxu0 0
        %1646 = vmatprep.subr.bf16.mxu0 0
        %1647 = vmatpush1.bf16.msra.mxu0 0
        %1648 = vmatprep.subr.bf16.mxu0 0
        %1649 = vmatpush1.bf16.msra.mxu0 0
        %1650 = vmatprep.subr.bf16.mxu0 0
        %1651 = vmatpush1.bf16.msra.mxu0 0
        %1652 = vmatprep.subr.bf16.mxu0 0
        %1653 = vmatpush1.bf16.msra.mxu0 0
        %1654 = vmatprep.subr.bf16.mxu0 0
        %1655 = vmatpush1.bf16.msra.mxu0 0
        %1656 = vmatprep.subr.bf16.mxu0 0
        %1657 = vmatpush1.bf16.msra.mxu0 0
        %1658 = vmatprep.subr.bf16.mxu0 0
        %1659 = vmatpush1.bf16.msra.mxu0 0
        %1660 = vmatprep.mubr.bf16.mxu0 0
        %1661 = vmatmul.mubr.bf16.gmra.mrb[0].mxu0 %v1623
        %v1662 = vpop.f32.mrb[0].mxu0
        %v1663 = vadd.f32 0.0, %v1662
        %v1664 = vpop.f32.mrb[0].mxu0
        %v1665 = vpop.f32.mrb[0].mxu0
        %v1666 = vpop.f32.mrb[0].mxu0
        %1667 = vdwg.mxu0
        %v1668 = vpack.c.bf16 %v1663, %v1663
        %v1673 = vunpack.c.l.b16 %v1204
        %v1674 = vunpack.c.l.b16 %v1205
        %v1675 = vunpack.c.l.b16 %v1206
        %v1676 = vunpack.c.l.b16 %v1207
        %v1677 = vpack.c.b16 %v1674, %v1673
        %v1678 = vpack.c.b16 %v1676, %v1675
        %v1682 = vsel %vm1216, %v1668, 0
        %1684 = vmatprep.subr.bf16.mxu0 0
        %1685 = vmatpush1.bf16.msra.mxu0 %v1677
        %1686 = vmatprep.subr.bf16.mxu0 0
        %1687 = vmatpush1.bf16.msra.mxu0 %v1678
        %1688 = vmatprep.subr.bf16.mxu0 0
        %1689 = vmatpush1.bf16.msra.mxu0 0
        %1690 = vmatprep.subr.bf16.mxu0 0
        %1691 = vmatpush1.bf16.msra.mxu0 0
        %1692 = vmatprep.subr.bf16.mxu0 0
        %1693 = vmatpush1.bf16.msra.mxu0 0
        %1694 = vmatprep.subr.bf16.mxu0 0
        %1695 = vmatpush1.bf16.msra.mxu0 0
        %1696 = vmatprep.subr.bf16.mxu0 0
        %1697 = vmatpush1.bf16.msra.mxu0 0
        %1698 = vmatprep.subr.bf16.mxu0 0
        %1699 = vmatpush1.bf16.msra.mxu0 0
        %1700 = vmatprep.subr.bf16.mxu0 0
        %1701 = vmatpush1.bf16.msra.mxu0 0
        %1702 = vmatprep.subr.bf16.mxu0 0
        %1703 = vmatpush1.bf16.msra.mxu0 0
        %1704 = vmatprep.subr.bf16.mxu0 0
        %1705 = vmatpush1.bf16.msra.mxu0 0
        %1706 = vmatprep.subr.bf16.mxu0 0
        %1707 = vmatpush1.bf16.msra.mxu0 0
        %1708 = vmatprep.subr.bf16.mxu0 0
        %1709 = vmatpush1.bf16.msra.mxu0 0
        %1710 = vmatprep.subr.bf16.mxu0 0
        %1711 = vmatpush1.bf16.msra.mxu0 0
        %1712 = vmatprep.subr.bf16.mxu0 0
        %1713 = vmatpush1.bf16.msra.mxu0 0
        %1714 = vmatprep.subr.bf16.mxu0 0
        %1715 = vmatpush1.bf16.msra.mxu0 0
        %1716 = vmatprep.mubr.bf16.mxu0 0
        %1717 = vmatmul.mubr.bf16.gmra.mrb[0].mxu0 %v1682
        %v1718 = vpop.f32.mrb[0].mxu0
        %v1719 = vadd.f32 0.0, %v1718
        %v1720 = vpop.f32.mrb[0].mxu0
        %v1721 = vpop.f32.mrb[0].mxu0
        %v1722 = vpop.f32.mrb[0].mxu0
        %1723 = vdwg.mxu0
        %v1724 = vadd.f32 %v1552, %v1719
        %1725 = vrot.lane.b32.xlu0 %v1213, 32
        %v1726 = vpop.permute.xlu0 %1725
        %1727 = vrot.lane.b32.xlu0 %v1214, 32
        %v1728 = vpop.permute.xlu0 %1727
        %v1730 = vsel %vm1216, %v1726, 0
        %v1733 = vsel %vm1216, %v1728, 0
        %1735 = vmatprep.subr.bf16.mxu0 0
        %1736 = vmatpush1.bf16.xpose.msra.mxu0 %v1733
        %1737 = vmatprep.subr.bf16.mxu0 0
        %1738 = vmatpush1.bf16.xpose.msra.mxu0 0
        %1739 = vmatprep.subr.bf16.mxu0 0
        %1740 = vmatpush1.bf16.xpose.msra.mxu0 0
        %1741 = vmatprep.subr.bf16.mxu0 0
        %1742 = vmatpush1.bf16.xpose.msra.mxu0 0
        %1743 = vmatprep.subr.bf16.mxu0 0
        %1744 = vmatpush1.bf16.xpose.msra.mxu0 0
        %1745 = vmatprep.subr.bf16.mxu0 0
        %1746 = vmatpush1.bf16.xpose.msra.mxu0 0
        %1747 = vmatprep.subr.bf16.mxu0 0
        %1748 = vmatpush1.bf16.xpose.msra.mxu0 0
        %1749 = vmatprep.subr.bf16.mxu0 0
        %1750 = vmatpush1.bf16.xpose.msra.mxu0 0
        %1751 = vmatprep.subr.bf16.mxu0 0
        %1752 = vmatpush1.bf16.xpose.msra.mxu0 0
        %1753 = vmatprep.subr.bf16.mxu0 0
        %1754 = vmatpush1.bf16.xpose.msra.mxu0 0
        %1755 = vmatprep.subr.bf16.mxu0 0
        %1756 = vmatpush1.bf16.xpose.msra.mxu0 0
        %1757 = vmatprep.subr.bf16.mxu0 0
        %1758 = vmatpush1.bf16.xpose.msra.mxu0 0
        %1759 = vmatprep.subr.bf16.mxu0 0
        %1760 = vmatpush1.bf16.xpose.msra.mxu0 0
        %1761 = vmatprep.subr.bf16.mxu0 0
        %1762 = vmatpush1.bf16.xpose.msra.mxu0 0
        %1763 = vmatprep.subr.bf16.mxu0 0
        %1764 = vmatpush1.bf16.xpose.msra.mxu0 0
        %1765 = vmatprep.subr.bf16.mxu0 0
        %1766 = vmatpush1.bf16.xpose.msra.mxu0 0
        %1767 = vmatprep.mubr.bf16.mxu0 0
        %1768 = vmatmul.mubr.bf16.gmra.mrb[0].mxu0 %v1730
        %v1769 = vpop.f32.mrb[0].mxu0
        %v1770 = vadd.f32 0.0, %v1769
        %v1771 = vpop.f32.mrb[0].mxu0
        %v1772 = vpop.f32.mrb[0].mxu0
        %v1773 = vpop.f32.mrb[0].mxu0
        %1774 = vdwg.mxu0
        %v1775 = vsel %vm1269, -1e+09, %v1770
        %v1776 = vsel %vm1271, %v1775, -inf
        %1777 = vmax.xlane.f32.xlu0 %v1776
        %v1778 = vpop.xlane.xlu0 %1777
        %v1779 = vsub.f32 %v1775, %v1778
        %v1780 = vmul.f32 %v1779, 1.442695
        %v1781 = vpow.pop %v1780
        %v1782 = vsel %vm1271, %v1781, 0.0
        %1783 = vadd.xlane.f32.xlu0 %v1782
        %v1784 = vpop.xlane.xlu0 %1783
        %v1785 = vrcp.pop %v1784
        %v1786 = vmul.f32 %v1781, %v1785
        %v1787 = vpack.c.bf16 %v1786, %v1786
        %1788 = vrot.lane.b32.xlu0 %v1215, 32
        %v1789 = vpop.permute.xlu0 %1788
        %v1791 = vsel %vm1271, %v1787, 0
        %v1794 = vsel %vm1287, %v1789, 0
        %1796 = vmatprep.subr.bf16.mxu0 0
        %1797 = vmatpush1.bf16.msra.mxu0 %v1794
        %1798 = vmatprep.subr.bf16.mxu0 0
        %1799 = vmatpush1.bf16.msra.mxu0 0
        %1800 = vmatprep.subr.bf16.mxu0 0
        %1801 = vmatpush1.bf16.msra.mxu0 0
        %1802 = vmatprep.subr.bf16.mxu0 0
        %1803 = vmatpush1.bf16.msra.mxu0 0
        %1804 = vmatprep.subr.bf16.mxu0 0
        %1805 = vmatpush1.bf16.msra.mxu0 0
        %1806 = vmatprep.subr.bf16.mxu0 0
        %1807 = vmatpush1.bf16.msra.mxu0 0
        %1808 = vmatprep.subr.bf16.mxu0 0
        %1809 = vmatpush1.bf16.msra.mxu0 0
        %1810 = vmatprep.subr.bf16.mxu0 0
        %1811 = vmatpush1.bf16.msra.mxu0 0
        %1812 = vmatprep.subr.bf16.mxu0 0
        %1813 = vmatpush1.bf16.msra.mxu0 0
        %1814 = vmatprep.subr.bf16.mxu0 0
        %1815 = vmatpush1.bf16.msra.mxu0 0
        %1816 = vmatprep.subr.bf16.mxu0 0
        %1817 = vmatpush1.bf16.msra.mxu0 0
        %1818 = vmatprep.subr.bf16.mxu0 0
        %1819 = vmatpush1.bf16.msra.mxu0 0
        %1820 = vmatprep.subr.bf16.mxu0 0
        %1821 = vmatpush1.bf16.msra.mxu0 0
        %1822 = vmatprep.subr.bf16.mxu0 0
        %1823 = vmatpush1.bf16.msra.mxu0 0
        %1824 = vmatprep.subr.bf16.mxu0 0
        %1825 = vmatpush1.bf16.msra.mxu0 0
        %1826 = vmatprep.subr.bf16.mxu0 0
        %1827 = vmatpush1.bf16.msra.mxu0 0
        %1828 = vmatprep.mubr.bf16.mxu0 0
        %1829 = vmatmul.mubr.bf16.gmra.mrb[0].mxu0 %v1791
        %v1830 = vpop.f32.mrb[0].mxu0
        %v1831 = vadd.f32 0.0, %v1830
        %v1832 = vpop.f32.mrb[0].mxu0
        %v1833 = vpop.f32.mrb[0].mxu0
        %v1834 = vpop.f32.mrb[0].mxu0
        %1835 = vdwg.mxu0
        %v1836 = vpack.c.bf16 %v1831, %v1831
        %v1841 = vunpack.c.l.b16 %v1208
        %v1842 = vunpack.c.l.b16 %v1209
        %v1843 = vunpack.c.l.b16 %v1210
        %v1844 = vunpack.c.l.b16 %v1211
        %v1845 = vpack.c.b16 %v1842, %v1841
        %v1846 = vpack.c.b16 %v1844, %v1843
        %v1850 = vsel %vm1216, %v1836, 0
        %1852 = vmatprep.subr.bf16.mxu0 0
        %1853 = vmatpush1.bf16.msra.mxu0 %v1845
        %1854 = vmatprep.subr.bf16.mxu0 0
        %1855 = vmatpush1.bf16.msra.mxu0 %v1846
        %1856 = vmatprep.subr.bf16.mxu0 0
        %1857 = vmatpush1.bf16.msra.mxu0 0
        %1858 = vmatprep.subr.bf16.mxu0 0
        %1859 = vmatpush1.bf16.msra.mxu0 0
        %1860 = vmatprep.subr.bf16.mxu0 0
        %1861 = vmatpush1.bf16.msra.mxu0 0
        %1862 = vmatprep.subr.bf16.mxu0 0
        %1863 = vmatpush1.bf16.msra.mxu0 0
        %1864 = vmatprep.subr.bf16.mxu0 0
        %1865 = vmatpush1.bf16.msra.mxu0 0
        %1866 = vmatprep.subr.bf16.mxu0 0
        %1867 = vmatpush1.bf16.msra.mxu0 0
        %1868 = vmatprep.subr.bf16.mxu0 0
        %1869 = vmatpush1.bf16.msra.mxu0 0
        %1870 = vmatprep.subr.bf16.mxu0 0
        %1871 = vmatpush1.bf16.msra.mxu0 0
        %1872 = vmatprep.subr.bf16.mxu0 0
        %1873 = vmatpush1.bf16.msra.mxu0 0
        %1874 = vmatprep.subr.bf16.mxu0 0
        %1875 = vmatpush1.bf16.msra.mxu0 0
        %1876 = vmatprep.subr.bf16.mxu0 0
        %1877 = vmatpush1.bf16.msra.mxu0 0
        %1878 = vmatprep.subr.bf16.mxu0 0
        %1879 = vmatpush1.bf16.msra.mxu0 0
        %1880 = vmatprep.subr.bf16.mxu0 0
        %1881 = vmatpush1.bf16.msra.mxu0 0
        %1882 = vmatprep.subr.bf16.mxu0 0
        %1883 = vmatpush1.bf16.msra.mxu0 0
        %1884 = vmatprep.mubr.bf16.mxu0 0
        %1885 = vmatmul.mubr.bf16.gmra.mrb[0].mxu0 %v1850
        %v1886 = vpop.f32.mrb[0].mxu0
        %v1887 = vadd.f32 0.0, %v1886
        %v1888 = vpop.f32.mrb[0].mxu0
        %v1889 = vpop.f32.mrb[0].mxu0
        %v1890 = vpop.f32.mrb[0].mxu0
        %1891 = vdwg.mxu0
        %v1892 = vadd.f32 %v1724, %v1887
        %v1894 = vlaneseq
        %v1895 = vshrl.u32 %v1894, 7
        %v1896 = vsub.s32 0, %v1895
        %v1897 = vrot.slane %v1212, %v1896
        %v1899 = vadd.f32 %v1892, %v1897
        %v1900 = vadd.f32 %v899, %v1899
        %v1901 = vld [vmem:[%s881] sm:$0x1]
        %v1902 = vld [vmem:[%s884] sm:$0x1]
        %1903 = vadd.xlane.f32.xlu0 %v1900
        %v1904 = vpop.xlane.xlu0 %1903
        %v1905 = vmul.f32 %v1904, %v905
        %v1906 = vsub.f32 %v1900, %v1905
        %v1907 = vmul.f32 %v1906, %v1906
        %1908 = vadd.xlane.f32.xlu0 %v1907
        %v1909 = vpop.xlane.xlu0 %1908
        %v1910 = vmul.f32 %v1909, %v911
        %v1912 = vlaneseq
        %v1913 = vshrl.u32 %v1912, 7
        %v1914 = vsub.s32 0, %v1913
        %v1915 = vrot.slane %v1901, %v1914
        %v1917 = vmul.f32 %v1915, %v1906
        %v1918 = vrsqrt.pop %v1910
        %v1919 = vmul.f32 %v1910, %v1918
        %vm1920 = vcmp.eq.f32.partialorder %v1910, inf
        %v1921 = vsel %vm1920, %v1910, %v1919
        %vm1922 = vcmp.eq.f32.partialorder %v1910, 0.0
        %v1923 = vand.u32 %v1910, 2147483648
        %v1924 = vsel %vm1922, %v1923, %v1921
        %v1925 = vadd.f32 %v1924, 1e-06
        %v1926 = vrcp.pop %v1925
        %v1927 = vmul.f32 %v1917, %v1926
        %v1929 = vlaneseq
        %v1930 = vshrl.u32 %v1929, 7
        %v1931 = vsub.s32 0, %v1930
        %v1932 = vrot.slane %v1902, %v1931
        %v1934 = vadd.f32 %v1927, %v1932
        %v1935 = vpack.c.bf16 %v1934, %v1934
        %v1936 = vld [vmem:[%s762] sm:$0xff]
        %v1937 = vld [vmem:[%s762 + $0x8] sm:$0xff]
        %v1938 = vld [vmem:[%s762 + $0x10] sm:$0xff]
        %v1939 = vld [vmem:[%s762 + $0x18] sm:$0xff]
        %v1940 = vld [vmem:[%s762 + $0x20] sm:$0xff]
        %v1941 = vld [vmem:[%s762 + $0x28] sm:$0xff]
        %v1942 = vld [vmem:[%s762 + $0x30] sm:$0xff]
        %v1943 = vld [vmem:[%s762 + $0x38] sm:$0xff]
        %v1944 = vld [vmem:[%s762 + $0x40] sm:$0xff]
        %v1945 = vld [vmem:[%s762 + $0x48] sm:$0xff]
        %v1946 = vld [vmem:[%s762 + $0x50] sm:$0xff]
        %v1947 = vld [vmem:[%s762 + $0x58] sm:$0xff]
        %v1948 = vld [vmem:[%s762 + $0x60] sm:$0xff]
        %v1949 = vld [vmem:[%s762 + $0x68] sm:$0xff]
        %v1950 = vld [vmem:[%s762 + $0x70] sm:$0xff]
        %v1951 = vld [vmem:[%s762 + $0x78] sm:$0xff]
        %v1952 = vld [vmem:[%s888] sm:$0x3]
        %v1954 = vlaneseq
        %v1955 = vshrl.u32 %v1954, 7
        %v1956 = vsub.s32 0, %v1955
        %v1957 = vrot.slane %v1952, %v1956
        %v1958 = vlaneseq
        %v1959 = vshrl.u32 %v1958, 7
        %v1960 = vsub.s32 1, %v1959
        %v1961 = vrot.slane %v1952, %v1960
        %v1980 = vunpack.c.l.b16 %v1936
        %v1981 = vunpack.c.h.b16 %v1936
        %v1982 = vunpack.c.l.b16 %v1937
        %v1983 = vunpack.c.h.b16 %v1937
        %v1984 = vunpack.c.l.b16 %v1938
        %v1985 = vunpack.c.h.b16 %v1938
        %v1986 = vunpack.c.l.b16 %v1939
        %v1987 = vunpack.c.h.b16 %v1939
        %v1988 = vunpack.c.l.b16 %v1940
        %v1989 = vunpack.c.h.b16 %v1940
        %v1990 = vunpack.c.l.b16 %v1941
        %v1991 = vunpack.c.h.b16 %v1941
        %v1992 = vunpack.c.l.b16 %v1942
        %v1993 = vunpack.c.h.b16 %v1942
        %v1994 = vunpack.c.l.b16 %v1943
        %v1995 = vunpack.c.h.b16 %v1943
        %v1996 = vunpack.c.l.b16 %v1944
        %v1997 = vunpack.c.h.b16 %v1944
        %v1998 = vunpack.c.l.b16 %v1945
        %v1999 = vunpack.c.h.b16 %v1945
        %v2000 = vunpack.c.l.b16 %v1946
        %v2001 = vunpack.c.h.b16 %v1946
        %v2002 = vunpack.c.l.b16 %v1947
        %v2003 = vunpack.c.h.b16 %v1947
        %v2004 = vunpack.c.l.b16 %v1948
        %v2005 = vunpack.c.h.b16 %v1948
        %v2006 = vunpack.c.l.b16 %v1949
        %v2007 = vunpack.c.h.b16 %v1949
        %v2008 = vunpack.c.l.b16 %v1950
        %v2009 = vunpack.c.h.b16 %v1950
        %v2010 = vunpack.c.l.b16 %v1951
        %v2011 = vunpack.c.h.b16 %v1951
        %v2012 = vpack.c.b16 %v1982, %v1980
        %v2013 = vpack.c.b16 %v1983, %v1981
        %v2014 = vpack.c.b16 %v1986, %v1984
        %v2015 = vpack.c.b16 %v1987, %v1985
        %v2016 = vpack.c.b16 %v1990, %v1988
        %v2017 = vpack.c.b16 %v1991, %v1989
        %v2018 = vpack.c.b16 %v1994, %v1992
        %v2019 = vpack.c.b16 %v1995, %v1993
        %v2020 = vpack.c.b16 %v1998, %v1996
        %v2021 = vpack.c.b16 %v1999, %v1997
        %v2022 = vpack.c.b16 %v2002, %v2000
        %v2023 = vpack.c.b16 %v2003, %v2001
        %v2024 = vpack.c.b16 %v2006, %v2004
        %v2025 = vpack.c.b16 %v2007, %v2005
        %v2026 = vpack.c.b16 %v2010, %v2008
        %v2027 = vpack.c.b16 %v2011, %v2009
        %2044 = vmatprep.subr.bf16.mxu0 %v2013
        %2045 = vmatpush1.bf16.msra.mxu0 %v2012
        %2046 = vmatprep.subr.bf16.mxu0 %v2015
        %2047 = vmatpush1.bf16.msra.mxu0 %v2014
        %2048 = vmatprep.subr.bf16.mxu0 %v2017
        %2049 = vmatpush1.bf16.msra.mxu0 %v2016
        %2050 = vmatprep.subr.bf16.mxu0 %v2019
        %2051 = vmatpush1.bf16.msra.mxu0 %v2018
        %2052 = vmatprep.subr.bf16.mxu0 %v2021
        %2053 = vmatpush1.bf16.msra.mxu0 %v2020
        %2054 = vmatprep.subr.bf16.mxu0 %v2023
        %2055 = vmatpush1.bf16.msra.mxu0 %v2022
        %2056 = vmatprep.subr.bf16.mxu0 %v2025
        %2057 = vmatpush1.bf16.msra.mxu0 %v2024
        %2058 = vmatprep.subr.bf16.mxu0 %v2027
        %2059 = vmatpush1.bf16.msra.mxu0 %v2026
        %2060 = vmatprep.subr.bf16.mxu0 0
        %2061 = vmatpush1.bf16.msra.mxu0 0
        %2062 = vmatprep.subr.bf16.mxu0 0
        %2063 = vmatpush1.bf16.msra.mxu0 0
        %2064 = vmatprep.subr.bf16.mxu0 0
        %2065 = vmatpush1.bf16.msra.mxu0 0
        %2066 = vmatprep.subr.bf16.mxu0 0
        %2067 = vmatpush1.bf16.msra.mxu0 0
        %2068 = vmatprep.subr.bf16.mxu0 0
        %2069 = vmatpush1.bf16.msra.mxu0 0
        %2070 = vmatprep.subr.bf16.mxu0 0
        %2071 = vmatpush1.bf16.msra.mxu0 0
        %2072 = vmatprep.subr.bf16.mxu0 0
        %2073 = vmatpush1.bf16.msra.mxu0 0
        %2074 = vmatprep.subr.bf16.mxu0 0
        %2075 = vmatpush1.bf16.msra.mxu0 0
        %2076 = vmatprep.mubr.bf16.mxu0 0
        %2077 = vmatmul.mubr.bf16.gmra.mrb[0].mxu0 %v1935
        %v2078 = vpop.f32.mrb[0].mxu0
        %v2079 = vadd.f32 %v1957, %v2078
        %v2080 = vpop.f32.mrb[0].mxu0
        %v2081 = vadd.f32 %v1961, %v2080
        %v2082 = vpop.f32.mrb[0].mxu0
        %v2083 = vpop.f32.mrb[0].mxu0
        %2084 = vdwg.mxu0
        %v2085 = vmax.f32 %v2079, 0.0
        %v2086 = vmax.f32 %v2081, 0.0
        %v2087 = vpack.c.bf16 %v2085, %v2085
        %v2088 = vpack.c.bf16 %v2086, %v2086
        %v2089 = vld [vmem:[%s771] sm:$0xf]
        %v2090 = vld [vmem:[%s771 + $0x4] sm:$0xf]
        %v2091 = vld [vmem:[%s771 + $0x8] sm:$0xf]
        %v2092 = vld [vmem:[%s771 + $0xc] sm:$0xf]
        %v2093 = vld [vmem:[%s771 + $0x10] sm:$0xf]
        %v2094 = vld [vmem:[%s771 + $0x14] sm:$0xf]
        %v2095 = vld [vmem:[%s771 + $0x18] sm:$0xf]
        %v2096 = vld [vmem:[%s771 + $0x1c] sm:$0xf]
        %v2097 = vld [vmem:[%s771 + $0x20] sm:$0xf]
        %v2098 = vld [vmem:[%s771 + $0x24] sm:$0xf]
        %v2099 = vld [vmem:[%s771 + $0x28] sm:$0xf]
        %v2100 = vld [vmem:[%s771 + $0x2c] sm:$0xf]
        %v2101 = vld [vmem:[%s771 + $0x30] sm:$0xf]
        %v2102 = vld [vmem:[%s771 + $0x34] sm:$0xf]
        %v2103 = vld [vmem:[%s771 + $0x38] sm:$0xf]
        %v2104 = vld [vmem:[%s771 + $0x3c] sm:$0xf]
        %v2105 = vld [vmem:[%s771 + $0x40] sm:$0xf]
        %v2106 = vld [vmem:[%s771 + $0x44] sm:$0xf]
        %v2107 = vld [vmem:[%s771 + $0x48] sm:$0xf]
        %v2108 = vld [vmem:[%s771 + $0x4c] sm:$0xf]
        %v2109 = vld [vmem:[%s771 + $0x50] sm:$0xf]
        %v2110 = vld [vmem:[%s771 + $0x54] sm:$0xf]
        %v2111 = vld [vmem:[%s771 + $0x58] sm:$0xf]
        %v2112 = vld [vmem:[%s771 + $0x5c] sm:$0xf]
        %v2113 = vld [vmem:[%s771 + $0x60] sm:$0xf]
        %v2114 = vld [vmem:[%s771 + $0x64] sm:$0xf]
        %v2115 = vld [vmem:[%s771 + $0x68] sm:$0xf]
        %v2116 = vld [vmem:[%s771 + $0x6c] sm:$0xf]
        %v2117 = vld [vmem:[%s771 + $0x70] sm:$0xf]
        %v2118 = vld [vmem:[%s771 + $0x74] sm:$0xf]
        %v2119 = vld [vmem:[%s771 + $0x78] sm:$0xf]
        %v2120 = vld [vmem:[%s771 + $0x7c] sm:$0xf]
        %v2153 = vunpack.c.l.b16 %v2089
        %v2154 = vunpack.c.l.b16 %v2090
        %v2155 = vunpack.c.l.b16 %v2091
        %v2156 = vunpack.c.l.b16 %v2092
        %v2157 = vunpack.c.l.b16 %v2093
        %v2158 = vunpack.c.l.b16 %v2094
        %v2159 = vunpack.c.l.b16 %v2095
        %v2160 = vunpack.c.l.b16 %v2096
        %v2161 = vunpack.c.l.b16 %v2097
        %v2162 = vunpack.c.l.b16 %v2098
        %v2163 = vunpack.c.l.b16 %v2099
        %v2164 = vunpack.c.l.b16 %v2100
        %v2165 = vunpack.c.l.b16 %v2101
        %v2166 = vunpack.c.l.b16 %v2102
        %v2167 = vunpack.c.l.b16 %v2103
        %v2168 = vunpack.c.l.b16 %v2104
        %v2169 = vunpack.c.l.b16 %v2105
        %v2170 = vunpack.c.l.b16 %v2106
        %v2171 = vunpack.c.l.b16 %v2107
        %v2172 = vunpack.c.l.b16 %v2108
        %v2173 = vunpack.c.l.b16 %v2109
        %v2174 = vunpack.c.l.b16 %v2110
        %v2175 = vunpack.c.l.b16 %v2111
        %v2176 = vunpack.c.l.b16 %v2112
        %v2177 = vunpack.c.l.b16 %v2113
        %v2178 = vunpack.c.l.b16 %v2114
        %v2179 = vunpack.c.l.b16 %v2115
        %v2180 = vunpack.c.l.b16 %v2116
        %v2181 = vunpack.c.l.b16 %v2117
        %v2182 = vunpack.c.l.b16 %v2118
        %v2183 = vunpack.c.l.b16 %v2119
        %v2184 = vunpack.c.l.b16 %v2120
        %v2185 = vpack.c.b16 %v2154, %v2153
        %v2186 = vpack.c.b16 %v2156, %v2155
        %v2187 = vpack.c.b16 %v2158, %v2157
        %v2188 = vpack.c.b16 %v2160, %v2159
        %v2189 = vpack.c.b16 %v2162, %v2161
        %v2190 = vpack.c.b16 %v2164, %v2163
        %v2191 = vpack.c.b16 %v2166, %v2165
        %v2192 = vpack.c.b16 %v2168, %v2167
        %v2193 = vpack.c.b16 %v2170, %v2169
        %v2194 = vpack.c.b16 %v2172, %v2171
        %v2195 = vpack.c.b16 %v2174, %v2173
        %v2196 = vpack.c.b16 %v2176, %v2175
        %v2197 = vpack.c.b16 %v2178, %v2177
        %v2198 = vpack.c.b16 %v2180, %v2179
        %v2199 = vpack.c.b16 %v2182, %v2181
        %v2200 = vpack.c.b16 %v2184, %v2183
        %2217 = vmatprep.subr.bf16.mxu0 0
        %2218 = vmatpush1.bf16.msra.mxu0 %v2185
        %2219 = vmatprep.subr.bf16.mxu0 0
        %2220 = vmatpush1.bf16.msra.mxu0 %v2186
        %2221 = vmatprep.subr.bf16.mxu0 0
        %2222 = vmatpush1.bf16.msra.mxu0 %v2187
        %2223 = vmatprep.subr.bf16.mxu0 0
        %2224 = vmatpush1.bf16.msra.mxu0 %v2188
        %2225 = vmatprep.subr.bf16.mxu0 0
        %2226 = vmatpush1.bf16.msra.mxu0 %v2189
        %2227 = vmatprep.subr.bf16.mxu0 0
        %2228 = vmatpush1.bf16.msra.mxu0 %v2190
        %2229 = vmatprep.subr.bf16.mxu0 0
        %2230 = vmatpush1.bf16.msra.mxu0 %v2191
        %2231 = vmatprep.subr.bf16.mxu0 0
        %2232 = vmatpush1.bf16.msra.mxu0 %v2192
        %2233 = vmatprep.subr.bf16.mxu0 0
        %2234 = vmatpush1.bf16.msra.mxu0 %v2193
        %2235 = vmatprep.subr.bf16.mxu0 0
        %2236 = vmatpush1.bf16.msra.mxu0 %v2194
        %2237 = vmatprep.subr.bf16.mxu0 0
        %2238 = vmatpush1.bf16.msra.mxu0 %v2195
        %2239 = vmatprep.subr.bf16.mxu0 0
        %2240 = vmatpush1.bf16.msra.mxu0 %v2196
        %2241 = vmatprep.subr.bf16.mxu0 0
        %2242 = vmatpush1.bf16.msra.mxu0 %v2197
        %2243 = vmatprep.subr.bf16.mxu0 0
        %2244 = vmatpush1.bf16.msra.mxu0 %v2198
        %2245 = vmatprep.subr.bf16.mxu0 0
        %2246 = vmatpush1.bf16.msra.mxu0 %v2199
        %2247 = vmatprep.subr.bf16.mxu0 0
        %2248 = vmatpush1.bf16.msra.mxu0 %v2200
        %2249 = vmatprep.mubr.bf16.mxu0 %v2088
        %2250 = vmatmul.mubr.bf16.gmra.mrb[0].mxu0 %v2087
        %v2251 = vpop.f32.mrb[0].mxu0
        %v2252 = vadd.f32 0.0, %v2251
        %v2253 = vpop.f32.mrb[0].mxu0
        %v2254 = vpop.f32.mrb[0].mxu0
        %v2255 = vpop.f32.mrb[0].mxu0
        %2256 = vdwg.mxu0
        %v2257 = vadd.f32 %v1900, %v2252
        %v2258 = vld [vmem:[%s891] sm:$0x1]
        %v2260 = vlaneseq
        %v2261 = vshrl.u32 %v2260, 7
        %v2262 = vsub.s32 0, %v2261
        %v2263 = vrot.slane %v2258, %v2262
        %v2265 = vadd.f32 %v2257, %v2263
        %2266 = vst [vmem:[#allocation2] sm:$0xff] %v2265
        %p2267 = scmp.eq.s32.totalorder %s50, 1
        // Predicated region
        $region121: #{tpu_custom_call.1} parent=83 // pred_check
          %p2268 = pneg %p2267
        $region122: #{tpu_custom_call.1} parent=83 // pred_check_branch
          %2270 = sbr.rel (%p2268) target = $region124
        $region123: #{tpu_custom_call.1} parent=83 // pred_region
          %v2271 = vld [vmem:[%s14] sm:$0x1]
          %v2272 = vld [vmem:[%s15] sm:$0x1]
          %2273 = vadd.xlane.f32.xlu0 %v2265
          %v2274 = vpop.xlane.xlu0 %2273
          %v2275 = vmul.f32 %v2274, %v905
          %v2276 = vsub.f32 %v2265, %v2275
          %v2277 = vmul.f32 %v2276, %v2276
          %2278 = vadd.xlane.f32.xlu0 %v2277
          %v2279 = vpop.xlane.xlu0 %2278
          %v2280 = vmul.f32 %v2279, %v911
          %v2282 = vlaneseq
          %v2283 = vshrl.u32 %v2282, 7
          %v2284 = vsub.s32 0, %v2283
          %v2285 = vrot.slane %v2271, %v2284
          %v2287 = vmul.f32 %v2285, %v2276
          %v2288 = vrsqrt.pop %v2280
          %v2289 = vmul.f32 %v2280, %v2288
          %vm2290 = vcmp.eq.f32.partialorder %v2280, inf
          %v2291 = vsel %vm2290, %v2280, %v2289
          %vm2292 = vcmp.eq.f32.partialorder %v2280, 0.0
          %v2293 = vand.u32 %v2280, 2147483648
          %v2294 = vsel %vm2292, %v2293, %v2291
          %v2295 = vadd.f32 %v2294, 1e-06
          %v2296 = vrcp.pop %v2295
          %v2297 = vmul.f32 %v2287, %v2296
          %v2299 = vlaneseq
          %v2300 = vshrl.u32 %v2299, 7
          %v2301 = vsub.s32 0, %v2300
          %v2302 = vrot.slane %v2272, %v2301
          %v2304 = vadd.f32 %v2297, %v2302
          %2305 = vst [vmem:[%s871] sm:$0xff] %v2304
        $region124: #{tpu_custom_call.1} parent=83 // pred_fallthru
          _
        %s2306 = sand.u32 %s471, 1
        %s2307 = scalar_lea.sflag [#allocation5], %s2306
        %s2308 = sand.u32 %s471, 1
        %s2309 = smul.addr %s2308, 8
        %s2310 = scalar_lea.vmem [#allocation17], %s2309
        // Predicated region
        $region125: #{tpu_custom_call.1} parent=83 // pred_check
          %p2311 = pneg %p481
        $region126: #{tpu_custom_call.1} parent=83 // pred_check_branch
          %2313 = sbr.rel (%p2311) target = $region128
        $region127: #{tpu_custom_call.1} parent=83 // pred_region
          %s2315 = ssub.s32 128, 128
          %2316 = vsyncadd %s2307, %s2315
          %s2317 = smul.addr %s49, 128
          %s2318 = scalar_lea.hbm %s16, %s2317
          %s2320 = sshll.u32 %s2310, 4
          %s2321 = int_to_ptr.vmem [resolvable:$true] %s2320
          %2323 = dma.vmem_to_hbm [thread:$0]  %s2321, 128, %s2318, %s2307
        $region128: #{tpu_custom_call.1} parent=83 // pred_fallthru
          _
      $region84: #{tpu_custom_call.1} parent=5 // pred_fallthru
        _
      %p2324 = scmp.le.s32.totalorder 2, %s40
      // Predicated region
      $region129: #{tpu_custom_call.1} parent=5 // pred_check
        %p2325 = pneg %p2324
      $region130: #{tpu_custom_call.1} parent=5 // pred_check_branch
        %2327 = sbr.rel (%p2325) target = $region132
      $region131: #{tpu_custom_call.1} parent=5 // pred_region
        %s2328 = ssub.s32 %s40, 2
        // Predicated region
        $region133: #{tpu_custom_call.1} parent=131 // pred_check
          %p2329 = pneg %p487
        $region134: #{tpu_custom_call.1} parent=131 // pred_check_branch
          %2331 = sbr.rel (%p2329) target = $region136
        $region135: #{tpu_custom_call.1} parent=131 // pred_region
          %s2332 = sand.u32 %s472, 1
          %s2333 = scalar_lea.sflag [#allocation5], %s2332
          %s2334 = sand.u32 %s472, 1
          %s2335 = smul.addr %s2334, 8
          %s2336 = scalar_lea.vmem [#allocation17], %s2335
          %2337 = dma.done %s2333, 128
        $region136: #{tpu_custom_call.1} parent=131 // pred_fallthru
          _
      $region132: #{tpu_custom_call.1} parent=5 // pred_fallthru
        _
    $region6: #{tpu_custom_call.1} parent=1 // loop_footer
      %s44 = sadd.s32 1, %s40
    $region7: #{tpu_custom_call.1} parent=1 // loop_footer_branch
      %39 = sbr.rel target = $region3
    $region8: #{tpu_custom_call.1} parent=1 // loop_exit
      _
    %2338 = vsyncpa [#allocation4], 1
    %s2339 = scalar_lea.sflag [#allocation4], 1
    %2340 = vsyncpa %s2339, 1
    %2341 = vsyncpa [#allocation7], 1
    %s2342 = scalar_lea.sflag [#allocation7], 1
    %2343 = vsyncpa %s2342, 1
    %2344 = vsyncpa [#allocation10], 1
    %s2345 = scalar_lea.sflag [#allocation10], 1
    %2346 = vsyncpa %s2345, 1
    %2347 = vsyncpa [#allocation13], 1
    %s2348 = scalar_lea.sflag [#allocation13], 1
    %2349 = vsyncpa %s2348, 1
    %2350 = vsyncpa [#allocation16], 1
    %s2351 = scalar_lea.sflag [#allocation16], 1
    %2352 = vsyncpa %s2351, 1
    %2353 = vsyncpa [#allocation5], 1
    %s2354 = scalar_lea.sflag [#allocation5], 1
    %2355 = vsyncpa %s2354, 1

</llo_original>
